<compile_context>
chip_gen: v7x
topology: tpu7x:2x2x1
jax: 0.10.0
libtpu: 0.0.40
codegen_flags: <defaults>
</compile_context>

<pallas_src>
import functools

import jax
import jax.numpy as jnp
from jax.experimental import pallas as pl
from jax.experimental.pallas import tpu as pltpu


def _round_up(x, m):
    return (x + m - 1) // m * m


def _tpu_vmem_capacity_bytes():
    try:
        return int(pltpu.get_tpu_info().vmem_capacity_bytes)
    except Exception:
        return 128 << 20


def _pick_row_tile(S, vmem_cap):
    # Bigger tiles amortize the ~0.35us/grid-step overhead; cap at 512 on
    # 64 MiB parts (v7x), 1024 on 128 MiB parts (v5e/v6e).
    cap = 512 if vmem_cap <= (64 << 20) else 1024
    if S <= cap:
        return S
    for ts in range(cap, 7, -8):
        if S % ts == 0:
            return ts
    return S


def _vmem_limit_bytes(S, TS, E, E_pad, FFH_pad, vmem_cap):
    bf16, f32 = 2, 4
    weights = (E_pad * 3 * E + E * E_pad + 2 * E_pad * FFH_pad) * bf16 \
        + (3 * E + 5 * E_pad + FFH_pad) * f32
    x_block = 2 * S * E_pad * f32                 # full-seq input (double-buffered over b)
    out_block = 2 * TS * E_pad * f32
    qkv_scratch = S * 3 * E * bf16
    live = (8 * TS * E_pad + 2 * TS * S + TS * FFH_pad + S * 3 * E) * f32
    est = int(1.5 * (weights + x_block + out_block + qkv_scratch + live)) + (2 << 20)
    ceiling = (vmem_cap * 3) // 4                 # ~48 MiB on v7x, ~96 MiB on v5e/v6e
    return min(max(est, 32 << 20), ceiling)


def transformer_block_kernel(
    x_ref,
    wqkv_ref, bqkv_ref, wo_ref, bo_ref,
    g1_ref, be1_ref, w1_ref, b1_ref, w2_ref, b2_ref, g2_ref, be2_ref,
    o_ref,
    qkv_scr,
    *, num_heads, e_real, ts,
):
    s = pl.program_id(1)
    S = x_ref.shape[1]
    E_pad = x_ref.shape[2]
    H = num_heads
    Dh = e_real // H
    scale = 1.0 / float(Dh) ** 0.5

    # ---- Once per batch (s == 0): fused Q|K|V projection over the full sequence.
    @pl.when(s == 0)
    def _():
        xs = x_ref[0].astype(jnp.bfloat16)                         # (S, E_pad)
        qkv = jnp.dot(xs, wqkv_ref[...],
                      preferred_element_type=jnp.float32) + bqkv_ref[...]
        qkv_scr[...] = qkv.astype(jnp.bfloat16)                    # (S, 3E)

    # ---- Row tile handled by this grid step.
    row = pl.multiple_of(s * ts, ts)
    x_tile = x_ref[0, pl.ds(row, ts), :]                           # (TS, E_pad) f32

    q_rows = qkv_scr[pl.ds(row, ts), :]                            # (TS, 3E) bf16
    kv_rows = qkv_scr[...]                                         # (S, 3E)  bf16

    # Per-head attention; contexts gathered into one (TS, E) slab, then a single
    # full-K output-projection matmul (no per-head W_o accumulation).
    dn = (((1,), (1,)), ((), ()))          # contract the head dim; no transpose
    ctx_parts = []
    for h in range(H):
        q_h = q_rows[:, h * Dh:(h + 1) * Dh]                              # (TS, Dh)
        k_h = kv_rows[:, e_real + h * Dh:e_real + (h + 1) * Dh]           # (S, Dh)
        v_h = kv_rows[:, 2 * e_real + h * Dh:2 * e_real + (h + 1) * Dh]   # (S, Dh)
        sc = jax.lax.dot_general(q_h, k_h, dn,
                                 preferred_element_type=jnp.float32) * scale
        sc = sc - jnp.max(sc, axis=-1, keepdims=True)
        p = jnp.exp(sc)                                                   # f32 (EUP)
        p = p * pl.reciprocal(jnp.sum(p, axis=-1, keepdims=True), approx=True)
        ctx_parts.append(jnp.dot(p.astype(jnp.bfloat16), v_h,
                                 preferred_element_type=jnp.float32))     # (TS, Dh)
    ctx = jnp.concatenate(ctx_parts, axis=-1)                             # (TS, E)

    attn = jnp.dot(ctx.astype(jnp.bfloat16), wo_ref[...],
                   preferred_element_type=jnp.float32) + bo_ref[...]      # (TS, E_pad)

    # Masked two-pass LayerNorm over the real embedding width (padded lanes are 0,
    # gamma/beta padded lanes are 0, so padded columns stay exactly 0 downstream).
    lane = jax.lax.broadcasted_iota(jnp.int32, (ts, E_pad), 1)
    lane_mask = lane < e_real
    inv_n = 1.0 / float(e_real)

    def layernorm(y, g, b, eps=1e-5):
        mu = jnp.sum(y, axis=-1, keepdims=True) * inv_n
        d = jnp.where(lane_mask, y - mu, 0.0)
        var = jnp.sum(d * d, axis=-1, keepdims=True) * inv_n
        return d * jax.lax.rsqrt(var + eps) * g + b

    # Residual + LayerNorm 1
    y = layernorm(x_tile + attn, g1_ref[...], be1_ref[...])

    # FFN: Linear -> ReLU -> Linear (bf16 MXU inputs, f32 accumulation).
    h1 = jnp.dot(y.astype(jnp.bfloat16), w1_ref[...],
                 preferred_element_type=jnp.float32) + b1_ref[...]
    h1 = jnp.maximum(h1, 0.0)
    ff = jnp.dot(h1.astype(jnp.bfloat16), w2_ref[...],
                 preferred_element_type=jnp.float32) + b2_ref[...]

    # Residual + LayerNorm 2; lane-dense (E_pad) output store.
    z = layernorm(y + ff, g2_ref[...], be2_ref[...])
    o_ref[0] = z.astype(o_ref.dtype)


def _pad2(a, rows, cols):
    return jnp.pad(a, ((0, rows - a.shape[0]), (0, cols - a.shape[1])))


def transformer_block(x, params, num_heads):
    B, S, E = x.shape
    FFH = params["w1"].shape[1]
    assert E % num_heads == 0
    assert S % 8 == 0, "sequence length must be a multiple of 8"

    vmem_cap = _tpu_vmem_capacity_bytes()
    E_pad = _round_up(E, 128)
    FFH_pad = _round_up(FFH, 128)
    TS = _pick_row_tile(S, vmem_cap)
    n_s = S // TS

    # Host-side packing: bf16 weights, fused Q|K|V, zero-padding to lane-dense widths.
    wqkv = jnp.concatenate([params["wq"], params["wk"], params["wv"]], axis=1)  # (E, 3E)
    wqkv = _pad2(wqkv, E_pad, 3 * E).astype(jnp.bfloat16)                       # rows padded
    bqkv = jnp.concatenate([params["bq"], params["bk"], params["bv"]], axis=1)  # (1, 3E)
    wo = _pad2(params["wo"], E, E_pad).astype(jnp.bfloat16)                     # (E, E_pad)
    bo = _pad2(params["bo"], 1, E_pad)
    w1 = _pad2(params["w1"], E_pad, FFH_pad).astype(jnp.bfloat16)
    b1 = _pad2(params["b1"], 1, FFH_pad)
    w2 = _pad2(params["w2"], FFH_pad, E_pad).astype(jnp.bfloat16)
    b2 = _pad2(params["b2"], 1, E_pad)
    g1 = _pad2(params["ln1_g"], 1, E_pad)
    be1 = _pad2(params["ln1_b"], 1, E_pad)
    g2 = _pad2(params["ln2_g"], 1, E_pad)
    be2 = _pad2(params["ln2_b"], 1, E_pad)

    x_pad = jnp.pad(x, ((0, 0), (0, 0), (0, E_pad - E)))

    # Grid-invariant parameters: whole-array VMEM residency, no double-buffering.
    vmem_spec = pl.BlockSpec(memory_space=pltpu.MemorySpace.VMEM)
    in_specs = [
        # Full padded sequence per batch; block index depends only on b, so the
        # DMA happens once per batch (row tile sliced inside the kernel).
        pl.BlockSpec((1, S, E_pad), lambda b, s: (b, 0, 0)),
    ] + [vmem_spec] * 12

    kernel = functools.partial(transformer_block_kernel,
                               num_heads=num_heads, e_real=E, ts=TS)

    flops = (2 * B * S * E_pad * 3 * E          # fused QKV projection
             + 4 * B * S * S * E                # QK^T + PV over all heads
             + 2 * B * S * E * E_pad            # output projection
             + 4 * B * S * E_pad * FFH_pad)     # FFN (two matmuls)
    transcendentals = B * num_heads * S * S + 4 * B * S
    bytes_accessed = (2 * B * S * E_pad * 4
                      + (E_pad * 3 * E + E * E_pad + 2 * E_pad * FFH_pad) * 2)

    out = pl.pallas_call(
        kernel,
        out_shape=jax.ShapeDtypeStruct((B, S, E_pad), x.dtype),
        grid_spec=pltpu.PrefetchScalarGridSpec(
            num_scalar_prefetch=0,
            grid=(B, n_s),
            in_specs=in_specs,
            out_specs=pl.BlockSpec((1, TS, E_pad), lambda b, s: (b, s, 0)),
            scratch_shapes=[pltpu.VMEM((S, 3 * E), jnp.bfloat16)],
        ),
        compiler_params=pltpu.CompilerParams(
            # s is "arbitrary": the QKV cache written at s == 0 must stay on the
            # same core for all row tiles of a batch; b stays "parallel".
            dimension_semantics=("parallel", "arbitrary"),
            vmem_limit_bytes=_vmem_limit_bytes(S, TS, E, E_pad, FFH_pad, vmem_cap),
        ),
        cost_estimate=pl.CostEstimate(flops=flops,
                                      transcendentals=transcendentals,
                                      bytes_accessed=bytes_accessed),
    )(x_pad, wqkv, bqkv, wo, bo, g1, be1, w1, b1, w2, b2, g2, be2)

    return out[:, :, :E]


def _layernorm_ref(y, gamma, beta, eps=1e-5):
    mu = jnp.mean(y, axis=-1, keepdims=True)
    var = jnp.mean((y - mu) ** 2, axis=-1, keepdims=True)
    return (y - mu) * jax.lax.rsqrt(var + eps) * gamma + beta


def reference_forward(x, params, num_heads):
    """Pure-JAX f32 reference, same math as the PyTorch module (dropout = identity)."""
    B, S, E = x.shape
    Dh = E // num_heads
    scale = 1.0 / (Dh ** 0.5)

    q = x @ params["wq"] + params["bq"]
    k = x @ params["wk"] + params["bk"]
    v = x @ params["wv"] + params["bv"]

    def split(t):  # (B, S, E) -> (B, H, S, Dh)
        return t.reshape(B, S, num_heads, Dh).transpose(0, 2, 1, 3)

    qh, kh, vh = split(q), split(k), split(v)
    scores = jnp.einsum("bhqd,bhkd->bhqk", qh, kh) * scale
    p = jax.nn.softmax(scores, axis=-1)
    ctx = jnp.einsum("bhqk,bhkd->bhqd", p, vh).transpose(0, 2, 1, 3).reshape(B, S, E)

    attn_out = ctx @ params["wo"] + params["bo"]
    y = _layernorm_ref(x + attn_out, params["ln1_g"], params["ln1_b"])
    ff = jnp.maximum(y @ params["w1"] + params["b1"], 0.0) @ params["w2"] + params["b2"]
    return _layernorm_ref(y + ff, params["ln2_g"], params["ln2_b"])


def init_params(key, embed_size, ff_hidden_size):
    E, FFH = embed_size, ff_hidden_size
    keys = jax.random.split(key, 16)
    std = 0.02
    n = jax.random.normal
    return {
        "wq": n(keys[0], (E, E), jnp.float32) * std,
        "wk": n(keys[1], (E, E), jnp.float32) * std,
        "wv": n(keys[2], (E, E), jnp.float32) * std,
        "wo": n(keys[3], (E, E), jnp.float32) * std,
        "w1": n(keys[4], (E, FFH), jnp.float32) * std,
        "w2": n(keys[5], (FFH, E), jnp.float32) * std,
        "bq": n(keys[6], (1, E), jnp.float32) * std,
        "bk": n(keys[7], (1, E), jnp.float32) * std,
        "bv": n(keys[8], (1, E), jnp.float32) * std,
        "bo": n(keys[9], (1, E), jnp.float32) * std,
        "b1": n(keys[10], (1, FFH), jnp.float32) * std,
        "b2": n(keys[11], (1, E), jnp.float32) * std,
        "ln1_g": 1.0 + n(keys[12], (1, E), jnp.float32) * 0.05,
        "ln1_b": n(keys[13], (1, E), jnp.float32) * std,
        "ln2_g": 1.0 + n(keys[14], (1, E), jnp.float32) * 0.05,
        "ln2_b": n(keys[15], (1, E), jnp.float32) * std,
    }


if __name__ == "__main__":
    B, S, E, H, FFH = 2, 8, 64, 4, 128

    key = jax.random.PRNGKey(0)
    kx, kp = jax.random.split(key)
    x = jax.random.normal(kx, (B, S, E), jnp.float32)
    params = init_params(kp, E, FFH)

    out = jax.block_until_ready(transformer_block(x, params, num_heads=H))
    ref = jax.block_until_ready(reference_forward(x, params, H))

    assert out.shape == (B, S, E)
    max_err = float(jnp.max(jnp.abs(out - ref)))
    # bf16 MXU inputs with f32 accumulation vs. a pure-f32 reference -> relaxed tol.
    assert max_err < 2e-2, max_err

    print("KERNEL_OK")
</pallas_src>

<mosaic_0001>
module attributes {stable_mosaic.version = 11 : i64} {
  func.func @transformer_block_kernel(%arg0: i32, %arg1: i32, %arg2: memref<1x8x128xf32, #tpu.memory_space<vmem>>, %arg3: memref<128x192xbf16, #tpu.memory_space<vmem>>, %arg4: memref<1x192xf32, #tpu.memory_space<vmem>>, %arg5: memref<64x128xbf16, #tpu.memory_space<vmem>>, %arg6: memref<1x128xf32, #tpu.memory_space<vmem>>, %arg7: memref<1x128xf32, #tpu.memory_space<vmem>>, %arg8: memref<1x128xf32, #tpu.memory_space<vmem>>, %arg9: memref<128x128xbf16, #tpu.memory_space<vmem>>, %arg10: memref<1x128xf32, #tpu.memory_space<vmem>>, %arg11: memref<128x128xbf16, #tpu.memory_space<vmem>>, %arg12: memref<1x128xf32, #tpu.memory_space<vmem>>, %arg13: memref<1x128xf32, #tpu.memory_space<vmem>>, %arg14: memref<1x128xf32, #tpu.memory_space<vmem>>, %arg15: memref<1x8x128xf32, #tpu.memory_space<vmem>>, %arg16: memref<8x192xbf16, #tpu.memory_space<vmem>>) attributes {dimension_semantics = [#tpu.dimension_semantics<parallel>, #tpu.dimension_semantics<arbitrary>], iteration_bounds = array<i64: 2, 1>, scalar_prefetch = 0 : i64, scratch_operands = 1 : i64, tpu.core_type = #tpu.core_type<tc>, window_params = [{transform_indices = @transform_0, window_bounds = array<i64: 1, 8, 128>}, {pipeline_mode = #tpu.pipeline_mode<synchronous>, transform_indices = @transform_1, window_bounds = array<i64: 128, 192>}, {pipeline_mode = #tpu.pipeline_mode<synchronous>, transform_indices = @transform_2, window_bounds = array<i64: 1, 192>}, {pipeline_mode = #tpu.pipeline_mode<synchronous>, transform_indices = @transform_3, window_bounds = array<i64: 64, 128>}, {pipeline_mode = #tpu.pipeline_mode<synchronous>, transform_indices = @transform_4, window_bounds = array<i64: 1, 128>}, {pipeline_mode = #tpu.pipeline_mode<synchronous>, transform_indices = @transform_5, window_bounds = array<i64: 1, 128>}, {pipeline_mode = #tpu.pipeline_mode<synchronous>, transform_indices = @transform_6, window_bounds = array<i64: 1, 128>}, {pipeline_mode = #tpu.pipeline_mode<synchronous>, transform_indices = @transform_7, window_bounds = array<i64: 128, 128>}, {pipeline_mode = #tpu.pipeline_mode<synchronous>, transform_indices = @transform_8, window_bounds = array<i64: 1, 128>}, {pipeline_mode = #tpu.pipeline_mode<synchronous>, transform_indices = @transform_9, window_bounds = array<i64: 128, 128>}, {pipeline_mode = #tpu.pipeline_mode<synchronous>, transform_indices = @transform_10, window_bounds = array<i64: 1, 128>}, {pipeline_mode = #tpu.pipeline_mode<synchronous>, transform_indices = @transform_11, window_bounds = array<i64: 1, 128>}, {pipeline_mode = #tpu.pipeline_mode<synchronous>, transform_indices = @transform_12, window_bounds = array<i64: 1, 128>}, {transform_indices = @transform_13, window_bounds = array<i64: 1, 8, 128>}]} {
    %c0_i32 = arith.constant 0 : i32
    %0 = arith.cmpi eq, %arg1, %c0_i32 : i32
    %1 = arith.extui %0 : i1 to i32
    %c0_i32_0 = arith.constant 0 : i32
    %2 = arith.cmpi ne, %1, %c0_i32_0 : i32
    scf.if %2 {
      %c0_63 = arith.constant 0 : index
      %c0_64 = arith.constant 0 : index
      %c0_65 = arith.constant 0 : index
      %160 = vector.load %arg2[%c0_63, %c0_64, %c0_65] : memref<1x8x128xf32, #tpu.memory_space<vmem>>, vector<1x8x128xf32>
      %161 = vector.shape_cast %160 : vector<1x8x128xf32> to vector<8x128xf32>
      %162 = arith.truncf %161 : vector<8x128xf32> to vector<8x128xbf16>
      %c0_66 = arith.constant 0 : index
      %c0_67 = arith.constant 0 : index
      %163 = vector.load %arg3[%c0_66, %c0_67] : memref<128x192xbf16, #tpu.memory_space<vmem>>, vector<128x192xbf16>
      %cst_68 = arith.constant dense<0.000000e+00> : vector<8x192xf32>
      %164 = tpu.matmul %162, %163, %cst_68 {dimension_numbers = #tpu.dot_dimension_numbers<[1], [0], [0], [1], [0, 0, 1, 1], [], []>} : vector<8x128xbf16>, vector<128x192xbf16>, vector<8x192xf32> -> vector<8x192xf32>
      %c0_69 = arith.constant 0 : index
      %c0_70 = arith.constant 0 : index
      %165 = vector.load %arg4[%c0_69, %c0_70] : memref<1x192xf32, #tpu.memory_space<vmem>>, vector<1x192xf32>
      %166 = vector.broadcast %165 : vector<1x192xf32> to vector<8x192xf32>
      %167 = arith.addf %164, %166 : vector<8x192xf32>
      %168 = arith.truncf %167 : vector<8x192xf32> to vector<8x192xbf16>
      %c0_71 = arith.constant 0 : index
      %c0_72 = arith.constant 0 : index
      %169 = vector.load %arg16[%c0_71, %c0_72] : memref<8x192xbf16, #tpu.memory_space<vmem>>, vector<8x192xbf16>
      tpu.vector_store %arg16[%c0_71, %c0_72], %168 {strides = array<i32>} : memref<8x192xbf16, #tpu.memory_space<vmem>>, vector<8x192xbf16>,
    } else {
    }
    %c8_i32 = arith.constant 8 : i32
    %3 = arith.muli %arg1, %c8_i32 : i32
    %4 = tpu.assume_multiple %3, 8 : i32
    %c0 = arith.constant 0 : index
    %5 = arith.index_cast %4 : i32 to index
    %c0_1 = arith.constant 0 : index
    %6 = vector.load %arg2[%c0, %5, %c0_1] : memref<1x8x128xf32, #tpu.memory_space<vmem>>, vector<1x8x128xf32>
    %7 = vector.shape_cast %6 : vector<1x8x128xf32> to vector<8x128xf32>
    %8 = arith.index_cast %4 : i32 to index
    %c0_2 = arith.constant 0 : index
    %9 = vector.load %arg16[%8, %c0_2] : memref<8x192xbf16, #tpu.memory_space<vmem>>, vector<8x192xbf16>
    %c0_3 = arith.constant 0 : index
    %c0_4 = arith.constant 0 : index
    %10 = vector.load %arg16[%c0_3, %c0_4] : memref<8x192xbf16, #tpu.memory_space<vmem>>, vector<8x192xbf16>
    %11 = vector.extract_strided_slice %9 {offsets = [0, 0], sizes = [8, 16], strides = [1, 1]} : vector<8x192xbf16> to vector<8x16xbf16>
    %12 = vector.extract_strided_slice %10 {offsets = [0, 64], sizes = [8, 16], strides = [1, 1]} : vector<8x192xbf16> to vector<8x16xbf16>
    %13 = vector.extract_strided_slice %10 {offsets = [0, 128], sizes = [8, 16], strides = [1, 1]} : vector<8x192xbf16> to vector<8x16xbf16>
    %cst = arith.constant dense<0.000000e+00> : vector<8x8xf32>
    %14 = tpu.matmul %11, %12, %cst {dimension_numbers = #tpu.dot_dimension_numbers<[1], [1], [0], [0], [0, 0, 1, 0], [], []>} : vector<8x16xbf16>, vector<8x16xbf16>, vector<8x8xf32> -> vector<8x8xf32>
    %cst_5 = arith.constant 2.500000e-01 : f32
    %15 = vector.broadcast %cst_5 : f32 to vector<8x8xf32>
    %16 = arith.mulf %14, %15 : vector<8x8xf32>
    %cst_6 = arith.constant dense<0xFF800000> : vector<8xf32>
    %17 = vector.multi_reduction <maximumf>, %16, %cst_6 [1] : vector<8x8xf32> to vector<8xf32>
    %18 = vector.shape_cast %17 : vector<8xf32> to vector<8x1xf32>
    %19 = vector.broadcast %18 : vector<8x1xf32> to vector<8x8xf32>
    %20 = arith.subf %16, %19 : vector<8x8xf32>
    %21 = math.exp %20 : vector<8x8xf32>
    %cst_7 = arith.constant dense<0.000000e+00> : vector<8xf32>
    %22 = vector.multi_reduction <add>, %21, %cst_7 [1] : vector<8x8xf32> to vector<8xf32>
    %23 = vector.shape_cast %22 : vector<8xf32> to vector<8x1xf32>
    %24 = tpu.reciprocal %23 {approx = true} : vector<8x1xf32> -> vector<8x1xf32>
    %25 = vector.broadcast %24 : vector<8x1xf32> to vector<8x8xf32>
    %26 = arith.mulf %21, %25 : vector<8x8xf32>
    %27 = arith.truncf %26 : vector<8x8xf32> to vector<8x8xbf16>
    %cst_8 = arith.constant dense<0.000000e+00> : vector<8x16xf32>
    %28 = tpu.matmul %27, %13, %cst_8 {dimension_numbers = #tpu.dot_dimension_numbers<[1], [0], [0], [1], [0, 0, 1, 1], [], []>} : vector<8x8xbf16>, vector<8x16xbf16>, vector<8x16xf32> -> vector<8x16xf32>
    %29 = vector.extract_strided_slice %9 {offsets = [0, 16], sizes = [8, 16], strides = [1, 1]} : vector<8x192xbf16> to vector<8x16xbf16>
    %30 = vector.extract_strided_slice %10 {offsets = [0, 80], sizes = [8, 16], strides = [1, 1]} : vector<8x192xbf16> to vector<8x16xbf16>
    %31 = vector.extract_strided_slice %10 {offsets = [0, 144], sizes = [8, 16], strides = [1, 1]} : vector<8x192xbf16> to vector<8x16xbf16>
    %cst_9 = arith.constant dense<0.000000e+00> : vector<8x8xf32>
    %32 = tpu.matmul %29, %30, %cst_9 {dimension_numbers = #tpu.dot_dimension_numbers<[1], [1], [0], [0], [0, 0, 1, 0], [], []>} : vector<8x16xbf16>, vector<8x16xbf16>, vector<8x8xf32> -> vector<8x8xf32>
    %cst_10 = arith.constant 2.500000e-01 : f32
    %33 = vector.broadcast %cst_10 : f32 to vector<8x8xf32>
    %34 = arith.mulf %32, %33 : vector<8x8xf32>
    %cst_11 = arith.constant dense<0xFF800000> : vector<8xf32>
    %35 = vector.multi_reduction <maximumf>, %34, %cst_11 [1] : vector<8x8xf32> to vector<8xf32>
    %36 = vector.shape_cast %35 : vector<8xf32> to vector<8x1xf32>
    %37 = vector.broadcast %36 : vector<8x1xf32> to vector<8x8xf32>
    %38 = arith.subf %34, %37 : vector<8x8xf32>
    %39 = math.exp %38 : vector<8x8xf32>
    %cst_12 = arith.constant dense<0.000000e+00> : vector<8xf32>
    %40 = vector.multi_reduction <add>, %39, %cst_12 [1] : vector<8x8xf32> to vector<8xf32>
    %41 = vector.shape_cast %40 : vector<8xf32> to vector<8x1xf32>
    %42 = tpu.reciprocal %41 {approx = true} : vector<8x1xf32> -> vector<8x1xf32>
    %43 = vector.broadcast %42 : vector<8x1xf32> to vector<8x8xf32>
    %44 = arith.mulf %39, %43 : vector<8x8xf32>
    %45 = arith.truncf %44 : vector<8x8xf32> to vector<8x8xbf16>
    %cst_13 = arith.constant dense<0.000000e+00> : vector<8x16xf32>
    %46 = tpu.matmul %45, %31, %cst_13 {dimension_numbers = #tpu.dot_dimension_numbers<[1], [0], [0], [1], [0, 0, 1, 1], [], []>} : vector<8x8xbf16>, vector<8x16xbf16>, vector<8x16xf32> -> vector<8x16xf32>
    %47 = vector.extract_strided_slice %9 {offsets = [0, 32], sizes = [8, 16], strides = [1, 1]} : vector<8x192xbf16> to vector<8x16xbf16>
    %48 = vector.extract_strided_slice %10 {offsets = [0, 96], sizes = [8, 16], strides = [1, 1]} : vector<8x192xbf16> to vector<8x16xbf16>
    %49 = vector.extract_strided_slice %10 {offsets = [0, 160], sizes = [8, 16], strides = [1, 1]} : vector<8x192xbf16> to vector<8x16xbf16>
    %cst_14 = arith.constant dense<0.000000e+00> : vector<8x8xf32>
    %50 = tpu.matmul %47, %48, %cst_14 {dimension_numbers = #tpu.dot_dimension_numbers<[1], [1], [0], [0], [0, 0, 1, 0], [], []>} : vector<8x16xbf16>, vector<8x16xbf16>, vector<8x8xf32> -> vector<8x8xf32>
    %cst_15 = arith.constant 2.500000e-01 : f32
    %51 = vector.broadcast %cst_15 : f32 to vector<8x8xf32>
    %52 = arith.mulf %50, %51 : vector<8x8xf32>
    %cst_16 = arith.constant dense<0xFF800000> : vector<8xf32>
    %53 = vector.multi_reduction <maximumf>, %52, %cst_16 [1] : vector<8x8xf32> to vector<8xf32>
    %54 = vector.shape_cast %53 : vector<8xf32> to vector<8x1xf32>
    %55 = vector.broadcast %54 : vector<8x1xf32> to vector<8x8xf32>
    %56 = arith.subf %52, %55 : vector<8x8xf32>
    %57 = math.exp %56 : vector<8x8xf32>
    %cst_17 = arith.constant dense<0.000000e+00> : vector<8xf32>
    %58 = vector.multi_reduction <add>, %57, %cst_17 [1] : vector<8x8xf32> to vector<8xf32>
    %59 = vector.shape_cast %58 : vector<8xf32> to vector<8x1xf32>
    %60 = tpu.reciprocal %59 {approx = true} : vector<8x1xf32> -> vector<8x1xf32>
    %61 = vector.broadcast %60 : vector<8x1xf32> to vector<8x8xf32>
    %62 = arith.mulf %57, %61 : vector<8x8xf32>
    %63 = arith.truncf %62 : vector<8x8xf32> to vector<8x8xbf16>
    %cst_18 = arith.constant dense<0.000000e+00> : vector<8x16xf32>
    %64 = tpu.matmul %63, %49, %cst_18 {dimension_numbers = #tpu.dot_dimension_numbers<[1], [0], [0], [1], [0, 0, 1, 1], [], []>} : vector<8x8xbf16>, vector<8x16xbf16>, vector<8x16xf32> -> vector<8x16xf32>
    %65 = vector.extract_strided_slice %9 {offsets = [0, 48], sizes = [8, 16], strides = [1, 1]} : vector<8x192xbf16> to vector<8x16xbf16>
    %66 = vector.extract_strided_slice %10 {offsets = [0, 112], sizes = [8, 16], strides = [1, 1]} : vector<8x192xbf16> to vector<8x16xbf16>
    %67 = vector.extract_strided_slice %10 {offsets = [0, 176], sizes = [8, 16], strides = [1, 1]} : vector<8x192xbf16> to vector<8x16xbf16>
    %cst_19 = arith.constant dense<0.000000e+00> : vector<8x8xf32>
    %68 = tpu.matmul %65, %66, %cst_19 {dimension_numbers = #tpu.dot_dimension_numbers<[1], [1], [0], [0], [0, 0, 1, 0], [], []>} : vector<8x16xbf16>, vector<8x16xbf16>, vector<8x8xf32> -> vector<8x8xf32>
    %cst_20 = arith.constant 2.500000e-01 : f32
    %69 = vector.broadcast %cst_20 : f32 to vector<8x8xf32>
    %70 = arith.mulf %68, %69 : vector<8x8xf32>
    %cst_21 = arith.constant dense<0xFF800000> : vector<8xf32>
    %71 = vector.multi_reduction <maximumf>, %70, %cst_21 [1] : vector<8x8xf32> to vector<8xf32>
    %72 = vector.shape_cast %71 : vector<8xf32> to vector<8x1xf32>
    %73 = vector.broadcast %72 : vector<8x1xf32> to vector<8x8xf32>
    %74 = arith.subf %70, %73 : vector<8x8xf32>
    %75 = math.exp %74 : vector<8x8xf32>
    %cst_22 = arith.constant dense<0.000000e+00> : vector<8xf32>
    %76 = vector.multi_reduction <add>, %75, %cst_22 [1] : vector<8x8xf32> to vector<8xf32>
    %77 = vector.shape_cast %76 : vector<8xf32> to vector<8x1xf32>
    %78 = tpu.reciprocal %77 {approx = true} : vector<8x1xf32> -> vector<8x1xf32>
    %79 = vector.broadcast %78 : vector<8x1xf32> to vector<8x8xf32>
    %80 = arith.mulf %75, %79 : vector<8x8xf32>
    %81 = arith.truncf %80 : vector<8x8xf32> to vector<8x8xbf16>
    %cst_23 = arith.constant dense<0.000000e+00> : vector<8x16xf32>
    %82 = tpu.matmul %81, %67, %cst_23 {dimension_numbers = #tpu.dot_dimension_numbers<[1], [0], [0], [1], [0, 0, 1, 1], [], []>} : vector<8x8xbf16>, vector<8x16xbf16>, vector<8x16xf32> -> vector<8x16xf32>
    %83 = tpu.concatenate %28, %46, %64, %82 in 1 : vector<8x16xf32>, vector<8x16xf32>, vector<8x16xf32>, vector<8x16xf32> -> vector<8x64xf32>
    %84 = arith.truncf %83 : vector<8x64xf32> to vector<8x64xbf16>
    %c0_24 = arith.constant 0 : index
    %c0_25 = arith.constant 0 : index
    %85 = vector.load %arg5[%c0_24, %c0_25] : memref<64x128xbf16, #tpu.memory_space<vmem>>, vector<64x128xbf16>
    %cst_26 = arith.constant dense<0.000000e+00> : vector<8x128xf32>
    %86 = tpu.matmul %84, %85, %cst_26 {dimension_numbers = #tpu.dot_dimension_numbers<[1], [0], [0], [1], [0, 0, 1, 1], [], []>} : vector<8x64xbf16>, vector<64x128xbf16>, vector<8x128xf32> -> vector<8x128xf32>
    %c0_27 = arith.constant 0 : index
    %c0_28 = arith.constant 0 : index
    %87 = vector.load %arg6[%c0_27, %c0_28] : memref<1x128xf32, #tpu.memory_space<vmem>>, vector<1x128xf32>
    %88 = vector.broadcast %87 : vector<1x128xf32> to vector<8x128xf32>
    %89 = arith.addf %86, %88 : vector<8x128xf32>
    %90 = tpu.iota {dimensions = array<i32: 1>} : vector<8x128xi32>
    %c64_i32 = arith.constant 64 : i32
    %91 = vector.broadcast %c64_i32 : i32 to vector<8x128xi32>
    %92 = arith.cmpi slt, %90, %91 : vector<8x128xi32>
    %93 = arith.addf %7, %89 : vector<8x128xf32>
    %c0_29 = arith.constant 0 : index
    %c0_30 = arith.constant 0 : index
    %94 = vector.load %arg7[%c0_29, %c0_30] : memref<1x128xf32, #tpu.memory_space<vmem>>, vector<1x128xf32>
    %c0_31 = arith.constant 0 : index
    %c0_32 = arith.constant 0 : index
    %95 = vector.load %arg8[%c0_31, %c0_32] : memref<1x128xf32, #tpu.memory_space<vmem>>, vector<1x128xf32>
    %cst_33 = arith.constant dense<0.000000e+00> : vector<8xf32>
    %96 = vector.multi_reduction <add>, %93, %cst_33 [1] : vector<8x128xf32> to vector<8xf32>
    %97 = vector.shape_cast %96 : vector<8xf32> to vector<8x1xf32>
    %cst_34 = arith.constant 1.562500e-02 : f32
    %98 = vector.broadcast %cst_34 : f32 to vector<8x1xf32>
    %99 = arith.mulf %97, %98 : vector<8x1xf32>
    %100 = vector.broadcast %99 : vector<8x1xf32> to vector<8x128xf32>
    %101 = arith.subf %93, %100 : vector<8x128xf32>
    %cst_35 = arith.constant 0.000000e+00 : f32
    %102 = vector.broadcast %cst_35 : f32 to vector<8x128xf32>
    %103 = arith.select %92, %101, %102 : vector<8x128xi1>, vector<8x128xf32>
    %104 = arith.mulf %103, %103 : vector<8x128xf32>
    %cst_36 = arith.constant dense<0.000000e+00> : vector<8xf32>
    %105 = vector.multi_reduction <add>, %104, %cst_36 [1] : vector<8x128xf32> to vector<8xf32>
    %106 = vector.shape_cast %105 : vector<8xf32> to vector<8x1xf32>
    %cst_37 = arith.constant 1.562500e-02 : f32
    %107 = vector.broadcast %cst_37 : f32 to vector<8x1xf32>
    %108 = arith.mulf %106, %107 : vector<8x1xf32>
    %cst_38 = arith.constant 9.99999974E-6 : f32
    %109 = vector.broadcast %cst_38 : f32 to vector<8x1xf32>
    %110 = arith.addf %108, %109 : vector<8x1xf32>
    %111 = math.rsqrt %110 : vector<8x1xf32>
    %112 = vector.broadcast %111 : vector<8x1xf32> to vector<8x128xf32>
    %113 = arith.mulf %103, %112 : vector<8x128xf32>
    %114 = vector.broadcast %94 : vector<1x128xf32> to vector<8x128xf32>
    %115 = arith.mulf %113, %114 : vector<8x128xf32>
    %116 = vector.broadcast %95 : vector<1x128xf32> to vector<8x128xf32>
    %117 = arith.addf %115, %116 : vector<8x128xf32>
    %118 = arith.truncf %117 : vector<8x128xf32> to vector<8x128xbf16>
    %c0_39 = arith.constant 0 : index
    %c0_40 = arith.constant 0 : index
    %119 = vector.load %arg9[%c0_39, %c0_40] : memref<128x128xbf16, #tpu.memory_space<vmem>>, vector<128x128xbf16>
    %cst_41 = arith.constant dense<0.000000e+00> : vector<8x128xf32>
    %120 = tpu.matmul %118, %119, %cst_41 {dimension_numbers = #tpu.dot_dimension_numbers<[1], [0], [0], [1], [0, 0, 1, 1], [], []>} : vector<8x128xbf16>, vector<128x128xbf16>, vector<8x128xf32> -> vector<8x128xf32>
    %c0_42 = arith.constant 0 : index
    %c0_43 = arith.constant 0 : index
    %121 = vector.load %arg10[%c0_42, %c0_43] : memref<1x128xf32, #tpu.memory_space<vmem>>, vector<1x128xf32>
    %122 = vector.broadcast %121 : vector<1x128xf32> to vector<8x128xf32>
    %123 = arith.addf %120, %122 : vector<8x128xf32>
    %cst_44 = arith.constant 0.000000e+00 : f32
    %124 = vector.broadcast %cst_44 : f32 to vector<8x128xf32>
    %125 = arith.maximumf %123, %124 : vector<8x128xf32>
    %126 = arith.truncf %125 : vector<8x128xf32> to vector<8x128xbf16>
    %c0_45 = arith.constant 0 : index
    %c0_46 = arith.constant 0 : index
    %127 = vector.load %arg11[%c0_45, %c0_46] : memref<128x128xbf16, #tpu.memory_space<vmem>>, vector<128x128xbf16>
    %cst_47 = arith.constant dense<0.000000e+00> : vector<8x128xf32>
    %128 = tpu.matmul %126, %127, %cst_47 {dimension_numbers = #tpu.dot_dimension_numbers<[1], [0], [0], [1], [0, 0, 1, 1], [], []>} : vector<8x128xbf16>, vector<128x128xbf16>, vector<8x128xf32> -> vector<8x128xf32>
    %c0_48 = arith.constant 0 : index
    %c0_49 = arith.constant 0 : index
    %129 = vector.load %arg12[%c0_48, %c0_49] : memref<1x128xf32, #tpu.memory_space<vmem>>, vector<1x128xf32>
    %130 = vector.broadcast %129 : vector<1x128xf32> to vector<8x128xf32>
    %131 = arith.addf %128, %130 : vector<8x128xf32>
    %132 = arith.addf %117, %131 : vector<8x128xf32>
    %c0_50 = arith.constant 0 : index
    %c0_51 = arith.constant 0 : index
    %133 = vector.load %arg13[%c0_50, %c0_51] : memref<1x128xf32, #tpu.memory_space<vmem>>, vector<1x128xf32>
    %c0_52 = arith.constant 0 : index
    %c0_53 = arith.constant 0 : index
    %134 = vector.load %arg14[%c0_52, %c0_53] : memref<1x128xf32, #tpu.memory_space<vmem>>, vector<1x128xf32>
    %cst_54 = arith.constant dense<0.000000e+00> : vector<8xf32>
    %135 = vector.multi_reduction <add>, %132, %cst_54 [1] : vector<8x128xf32> to vector<8xf32>
    %136 = vector.shape_cast %135 : vector<8xf32> to vector<8x1xf32>
    %cst_55 = arith.constant 1.562500e-02 : f32
    %137 = vector.broadcast %cst_55 : f32 to vector<8x1xf32>
    %138 = arith.mulf %136, %137 : vector<8x1xf32>
    %139 = vector.broadcast %138 : vector<8x1xf32> to vector<8x128xf32>
    %140 = arith.subf %132, %139 : vector<8x128xf32>
    %cst_56 = arith.constant 0.000000e+00 : f32
    %141 = vector.broadcast %cst_56 : f32 to vector<8x128xf32>
    %142 = arith.select %92, %140, %141 : vector<8x128xi1>, vector<8x128xf32>
    %143 = arith.mulf %142, %142 : vector<8x128xf32>
    %cst_57 = arith.constant dense<0.000000e+00> : vector<8xf32>
    %144 = vector.multi_reduction <add>, %143, %cst_57 [1] : vector<8x128xf32> to vector<8xf32>
    %145 = vector.shape_cast %144 : vector<8xf32> to vector<8x1xf32>
    %cst_58 = arith.constant 1.562500e-02 : f32
    %146 = vector.broadcast %cst_58 : f32 to vector<8x1xf32>
    %147 = arith.mulf %145, %146 : vector<8x1xf32>
    %cst_59 = arith.constant 9.99999974E-6 : f32
    %148 = vector.broadcast %cst_59 : f32 to vector<8x1xf32>
    %149 = arith.addf %147, %148 : vector<8x1xf32>
    %150 = math.rsqrt %149 : vector<8x1xf32>
    %151 = vector.broadcast %150 : vector<8x1xf32> to vector<8x128xf32>
    %152 = arith.mulf %142, %151 : vector<8x128xf32>
    %153 = vector.broadcast %133 : vector<1x128xf32> to vector<8x128xf32>
    %154 = arith.mulf %152, %153 : vector<8x128xf32>
    %155 = vector.broadcast %134 : vector<1x128xf32> to vector<8x128xf32>
    %156 = arith.addf %154, %155 : vector<8x128xf32>
    %c0_60 = arith.constant 0 : index
    %c0_61 = arith.constant 0 : index
    %c0_62 = arith.constant 0 : index
    %157 = vector.load %arg15[%c0_60, %c0_61, %c0_62] : memref<1x8x128xf32, #tpu.memory_space<vmem>>, vector<1x8x128xf32>
    %158 = vector.shape_cast %157 : vector<1x8x128xf32> to vector<8x128xf32>
    %159 = vector.shape_cast %156 : vector<8x128xf32> to vector<1x8x128xf32>
    tpu.vector_store %arg15[%c0_60, %c0_61, %c0_62], %159 {strides = array<i32>} : memref<1x8x128xf32, #tpu.memory_space<vmem>>, vector<1x8x128xf32>,
    return
  }
  func.func @transform_0(%arg0: i32, %arg1: i32) -> (i32, i32, i32) {
    %c0_i32 = arith.constant 0 : i32
    %c0_i32_0 = arith.constant 0 : i32
    %c0_i32_1 = arith.constant 0 : i32
    return %arg0, %c0_i32, %c0_i32_0 : i32, i32, i32
  }
  func.func @transform_1(%arg0: i32, %arg1: i32) -> (i32, i32) {
    %c0_i32 = arith.constant 0 : i32
    %c0_i32_0 = arith.constant 0 : i32
    %c0_i32_1 = arith.constant 0 : i32
    return %c0_i32, %c0_i32_0 : i32, i32
  }
  func.func @transform_2(%arg0: i32, %arg1: i32) -> (i32, i32) {
    %c0_i32 = arith.constant 0 : i32
    %c0_i32_0 = arith.constant 0 : i32
    %c0_i32_1 = arith.constant 0 : i32
    return %c0_i32, %c0_i32_0 : i32, i32
  }
  func.func @transform_3(%arg0: i32, %arg1: i32) -> (i32, i32) {
    %c0_i32 = arith.constant 0 : i32
    %c0_i32_0 = arith.constant 0 : i32
    %c0_i32_1 = arith.constant 0 : i32
    return %c0_i32, %c0_i32_0 : i32, i32
  }
  func.func @transform_4(%arg0: i32, %arg1: i32) -> (i32, i32) {
    %c0_i32 = arith.constant 0 : i32
    %c0_i32_0 = arith.constant 0 : i32
    %c0_i32_1 = arith.constant 0 : i32
    return %c0_i32, %c0_i32_0 : i32, i32
  }
  func.func @transform_5(%arg0: i32, %arg1: i32) -> (i32, i32) {
    %c0_i32 = arith.constant 0 : i32
    %c0_i32_0 = arith.constant 0 : i32
    %c0_i32_1 = arith.constant 0 : i32
    return %c0_i32, %c0_i32_0 : i32, i32
  }
  func.func @transform_6(%arg0: i32, %arg1: i32) -> (i32, i32) {
    %c0_i32 = arith.constant 0 : i32
    %c0_i32_0 = arith.constant 0 : i32
    %c0_i32_1 = arith.constant 0 : i32
    return %c0_i32, %c0_i32_0 : i32, i32
  }
  func.func @transform_7(%arg0: i32, %arg1: i32) -> (i32, i32) {
    %c0_i32 = arith.constant 0 : i32
    %c0_i32_0 = arith.constant 0 : i32
    %c0_i32_1 = arith.constant 0 : i32
    return %c0_i32, %c0_i32_0 : i32, i32
  }
  func.func @transform_8(%arg0: i32, %arg1: i32) -> (i32, i32) {
    %c0_i32 = arith.constant 0 : i32
    %c0_i32_0 = arith.constant 0 : i32
    %c0_i32_1 = arith.constant 0 : i32
    return %c0_i32, %c0_i32_0 : i32, i32
  }
  func.func @transform_9(%arg0: i32, %arg1: i32) -> (i32, i32) {
    %c0_i32 = arith.constant 0 : i32
    %c0_i32_0 = arith.constant 0 : i32
    %c0_i32_1 = arith.constant 0 : i32
    return %c0_i32, %c0_i32_0 : i32, i32
  }
  func.func @transform_10(%arg0: i32, %arg1: i32) -> (i32, i32) {
    %c0_i32 = arith.constant 0 : i32
    %c0_i32_0 = arith.constant 0 : i32
    %c0_i32_1 = arith.constant 0 : i32
    return %c0_i32, %c0_i32_0 : i32, i32
  }
  func.func @transform_11(%arg0: i32, %arg1: i32) -> (i32, i32) {
    %c0_i32 = arith.constant 0 : i32
    %c0_i32_0 = arith.constant 0 : i32
    %c0_i32_1 = arith.constant 0 : i32
    return %c0_i32, %c0_i32_0 : i32, i32
  }
  func.func @transform_12(%arg0: i32, %arg1: i32) -> (i32, i32) {
    %c0_i32 = arith.constant 0 : i32
    %c0_i32_0 = arith.constant 0 : i32
    %c0_i32_1 = arith.constant 0 : i32
    return %c0_i32, %c0_i32_0 : i32, i32
  }
  func.func @transform_13(%arg0: i32, %arg1: i32) -> (i32, i32, i32) {
    %c0_i32 = arith.constant 0 : i32
    %c0_i32_0 = arith.constant 0 : i32
    return %arg0, %arg1, %c0_i32 : i32, i32, i32
  }
}

</mosaic_0001>

<llo_original>
// kernel: tpu_custom_call.1
$region0: #{tpu_custom_call.1}
  #allocation0 [shape = 'u32[]', space=smem, size = 0x4, offset = 0x4, fixed_abs, tag = 'smem constant byte address 0x4 - core index']
  #allocation1 [shape = 'u32[144,128]{1,0:T(1,128)}', space=vmem, size = 0x12000, scoped, tag = 'internal scratch']
  #allocation2 [shape = 'bf16[8,192]{1,0:T(8,128)(2,1)}', space=vmem, size = 0x1000, scoped, tag = 'scratch operand']
  %s0 = inlined_call_operand.vmem [shape: f32[2,8,128], index: 0, kind: input, shape index: {}]
  %s1 = inlined_call_operand.vmem [shape: bf16[128,192], index: 1, kind: input, shape index: {}]
  %s2 = inlined_call_operand.vmem [shape: f32[1,192], index: 2, kind: input, shape index: {}]
  %s3 = inlined_call_operand.vmem [shape: bf16[64,128], index: 3, kind: input, shape index: {}]
  %s4 = inlined_call_operand.vmem [shape: f32[1,128], index: 4, kind: input, shape index: {}]
  %s5 = inlined_call_operand.vmem [shape: f32[1,128], index: 5, kind: input, shape index: {}]
  %s6 = inlined_call_operand.vmem [shape: f32[1,128], index: 6, kind: input, shape index: {}]
  %s7 = inlined_call_operand.vmem [shape: bf16[128,128], index: 7, kind: input, shape index: {}]
  %s8 = inlined_call_operand.vmem [shape: f32[1,128], index: 8, kind: input, shape index: {}]
  %s9 = inlined_call_operand.vmem [shape: bf16[128,128], index: 9, kind: input, shape index: {}]
  %s10 = inlined_call_operand.vmem [shape: f32[1,128], index: 10, kind: input, shape index: {}]
  %s11 = inlined_call_operand.vmem [shape: f32[1,128], index: 11, kind: input, shape index: {}]
  %s12 = inlined_call_operand.vmem [shape: f32[1,128], index: 12, kind: input, shape index: {}]
  %s13 = inlined_call_operand.hbm [shape: f32[2,8,128], index: 13, kind: output, shape index: {}]
  %s14 = sld [smem:[#allocation0]]
  $region89: #{tpu_custom_call.1} parent=0
    _
  %s16 = ssub.s32 1, %s14
  %s17 = scalar_select 0, %s16, %s14
  $region1: #{tpu_custom_call.1} parent=0
    #allocation3 [shape = 'u8[8192]{0}', space=vmem, size = 0x2000, scoped, tag = 'output window, operand 0']
    #allocation4 [shape = 's32[2]{0}', space=sflag, size = 0x8, scoped, tag = 'scoped memory for tpu_custom_call.1']
    %18 = vsyncpa [#allocation4], 0
    %s19 = scalar_lea.sflag [#allocation4], 1
    %20 = vsyncpa %s19, 0
    loop: start=0, step=1, limit=4
    $region2: #{tpu_custom_call.1} parent=1 // loop_pre_header
      _
    $region3: #{tpu_custom_call.1} parent=1 // loop_header
      %s22 = sphi 0, %s26
      %p23 = scmp.ge.s32.totalorder %s22, 4
      %s29 = sphi 0, %s41
      %s30 = sphi 0, %s37
      %s31 = sphi 0, %s29
      %s32 = sphi 0, %s30
      %s33 = sphi 0, %s31
      %s34 = sphi 0, %s32
      %s44 = sphi 0, %s46
      %s47 = sphi 0, %s44
      %s48 = sphi 0, %s47
      %s64 = sphi 0, %s48
      %s68 = sphi 0, %s68
      %s70 = sphi 0, %s68
      %s71 = sphi 0, %s70
      %s85 = sphi 0, %s71
      %s89 = sphi 0, %s89
      %s91 = sphi 0, %s89
      %s92 = sphi 0, %s91
      %s106 = sphi 0, %s92
      %s110 = sphi 0, %s110
      %s112 = sphi 0, %s110
      %s113 = sphi 0, %s112
      %s127 = sphi 0, %s113
      %s131 = sphi 0, %s131
      %s133 = sphi 0, %s131
      %s134 = sphi 0, %s133
      %s148 = sphi 0, %s134
      %s152 = sphi 0, %s152
      %s154 = sphi 0, %s152
      %s155 = sphi 0, %s154
      %s169 = sphi 0, %s155
      %s173 = sphi 0, %s173
      %s175 = sphi 0, %s173
      %s176 = sphi 0, %s175
      %s190 = sphi 0, %s176
      %s194 = sphi 0, %s194
      %s196 = sphi 0, %s194
      %s197 = sphi 0, %s196
      %s211 = sphi 0, %s197
      %s215 = sphi 0, %s215
      %s217 = sphi 0, %s215
      %s218 = sphi 0, %s217
      %s232 = sphi 0, %s218
      %s236 = sphi 0, %s236
      %s238 = sphi 0, %s236
      %s239 = sphi 0, %s238
      %s253 = sphi 0, %s239
      %s257 = sphi 0, %s257
      %s259 = sphi 0, %s257
      %s260 = sphi 0, %s259
      %s274 = sphi 0, %s260
      %s278 = sphi 0, %s278
      %s280 = sphi 0, %s278
      %s281 = sphi 0, %s280
      %s295 = sphi 0, %s281
      %s299 = sphi 0, %s299
      %s301 = sphi 0, %s299
      %s302 = sphi 0, %s301
      %s316 = sphi 0, %s302
      %s324 = sphi 0, %s326
      %s327 = sphi 0, %s324
      %s328 = sphi 0, %s327
      %s344 = sphi 0, %s328
    $region4: #{tpu_custom_call.1} parent=1 // loop_header_branch
      %25 = sbr.rel (%p23) target = $region8
    $region5: #{tpu_custom_call.1} parent=1 // loop_body
      %s27 = ssub.s32 %s22, 1
      %s28 = ssub.s32 %s22, 2
      %s35 = sadd.s32 1, %s30
      %p36 = scmp.ge.s32.totalorder %s35, 1
      %s37 = scalar_select %p36, 0, %s35
      %s38 = sadd.s32 1, %s29
      %s39 = scalar_select %p36, %s38, %s29
      %p40 = scmp.ge.s32.totalorder %s39, 2
      %s41 = scalar_select %p40, 0, %s39
      %s42 = ssub.s32 %s29, %s41
      %p43 = scmp.eq.s32.totalorder %s42, 0
      %s45 = sadd.s32 %s44, 1
      %s46 = scalar_select %p43, %s44, %s45
      %p49 = pneg %p43
      %p50 = scmp.eq.s32.totalorder %s22, 1
      %p51 = por %p49, %p50
      %p52 = scmp.ne.s32.totalorder %s44, %s47
      %p53 = scmp.eq.s32.totalorder %s22, 0
      %p54 = por %p52, %p53
      %p55 = scmp.ne.s32.totalorder %s44, %s47
      %p56 = scmp.eq.s32.totalorder %s27, 1
      %p57 = por %p55, %p56
      %p58 = scmp.ne.s32.totalorder %s47, %s48
      %p59 = scmp.eq.s32.totalorder %s27, 0
      %p60 = por %p58, %p59
      %p61 = scmp.ne.s32.totalorder %s47, %s48
      %p62 = scmp.eq.s32.totalorder %s28, 1
      %p63 = por %p61, %p62
      %p65 = scmp.ne.s32.totalorder %s48, %s64
      %p66 = scmp.eq.s32.totalorder %s28, 0
      %p67 = por %p65, %p66
      %s69 = sadd.s32 %s68, 1
      %p72 = scmp.eq.s32.totalorder %s22, 1
      %p73 = scmp.ne.s32.totalorder %s68, %s70
      %p74 = scmp.eq.s32.totalorder %s22, 0
      %p75 = por %p73, %p74
      %p76 = scmp.ne.s32.totalorder %s68, %s70
      %p77 = scmp.eq.s32.totalorder %s27, 1
      %p78 = por %p76, %p77
      %p79 = scmp.ne.s32.totalorder %s70, %s71
      %p80 = scmp.eq.s32.totalorder %s27, 0
      %p81 = por %p79, %p80
      %p82 = scmp.ne.s32.totalorder %s70, %s71
      %p83 = scmp.eq.s32.totalorder %s28, 1
      %p84 = por %p82, %p83
      %p86 = scmp.ne.s32.totalorder %s71, %s85
      %p87 = scmp.eq.s32.totalorder %s28, 0
      %p88 = por %p86, %p87
      %s90 = sadd.s32 %s89, 1
      %p93 = scmp.eq.s32.totalorder %s22, 1
      %p94 = scmp.ne.s32.totalorder %s89, %s91
      %p95 = scmp.eq.s32.totalorder %s22, 0
      %p96 = por %p94, %p95
      %p97 = scmp.ne.s32.totalorder %s89, %s91
      %p98 = scmp.eq.s32.totalorder %s27, 1
      %p99 = por %p97, %p98
      %p100 = scmp.ne.s32.totalorder %s91, %s92
      %p101 = scmp.eq.s32.totalorder %s27, 0
      %p102 = por %p100, %p101
      %p103 = scmp.ne.s32.totalorder %s91, %s92
      %p104 = scmp.eq.s32.totalorder %s28, 1
      %p105 = por %p103, %p104
      %p107 = scmp.ne.s32.totalorder %s92, %s106
      %p108 = scmp.eq.s32.totalorder %s28, 0
      %p109 = por %p107, %p108
      %s111 = sadd.s32 %s110, 1
      %p114 = scmp.eq.s32.totalorder %s22, 1
      %p115 = scmp.ne.s32.totalorder %s110, %s112
      %p116 = scmp.eq.s32.totalorder %s22, 0
      %p117 = por %p115, %p116
      %p118 = scmp.ne.s32.totalorder %s110, %s112
      %p119 = scmp.eq.s32.totalorder %s27, 1
      %p120 = por %p118, %p119
      %p121 = scmp.ne.s32.totalorder %s112, %s113
      %p122 = scmp.eq.s32.totalorder %s27, 0
      %p123 = por %p121, %p122
      %p124 = scmp.ne.s32.totalorder %s112, %s113
      %p125 = scmp.eq.s32.totalorder %s28, 1
      %p126 = por %p124, %p125
      %p128 = scmp.ne.s32.totalorder %s113, %s127
      %p129 = scmp.eq.s32.totalorder %s28, 0
      %p130 = por %p128, %p129
      %s132 = sadd.s32 %s131, 1
      %p135 = scmp.eq.s32.totalorder %s22, 1
      %p136 = scmp.ne.s32.totalorder %s131, %s133
      %p137 = scmp.eq.s32.totalorder %s22, 0
      %p138 = por %p136, %p137
      %p139 = scmp.ne.s32.totalorder %s131, %s133
      %p140 = scmp.eq.s32.totalorder %s27, 1
      %p141 = por %p139, %p140
      %p142 = scmp.ne.s32.totalorder %s133, %s134
      %p143 = scmp.eq.s32.totalorder %s27, 0
      %p144 = por %p142, %p143
      %p145 = scmp.ne.s32.totalorder %s133, %s134
      %p146 = scmp.eq.s32.totalorder %s28, 1
      %p147 = por %p145, %p146
      %p149 = scmp.ne.s32.totalorder %s134, %s148
      %p150 = scmp.eq.s32.totalorder %s28, 0
      %p151 = por %p149, %p150
      %s153 = sadd.s32 %s152, 1
      %p156 = scmp.eq.s32.totalorder %s22, 1
      %p157 = scmp.ne.s32.totalorder %s152, %s154
      %p158 = scmp.eq.s32.totalorder %s22, 0
      %p159 = por %p157, %p158
      %p160 = scmp.ne.s32.totalorder %s152, %s154
      %p161 = scmp.eq.s32.totalorder %s27, 1
      %p162 = por %p160, %p161
      %p163 = scmp.ne.s32.totalorder %s154, %s155
      %p164 = scmp.eq.s32.totalorder %s27, 0
      %p165 = por %p163, %p164
      %p166 = scmp.ne.s32.totalorder %s154, %s155
      %p167 = scmp.eq.s32.totalorder %s28, 1
      %p168 = por %p166, %p167
      %p170 = scmp.ne.s32.totalorder %s155, %s169
      %p171 = scmp.eq.s32.totalorder %s28, 0
      %p172 = por %p170, %p171
      %s174 = sadd.s32 %s173, 1
      %p177 = scmp.eq.s32.totalorder %s22, 1
      %p178 = scmp.ne.s32.totalorder %s173, %s175
      %p179 = scmp.eq.s32.totalorder %s22, 0
      %p180 = por %p178, %p179
      %p181 = scmp.ne.s32.totalorder %s173, %s175
      %p182 = scmp.eq.s32.totalorder %s27, 1
      %p183 = por %p181, %p182
      %p184 = scmp.ne.s32.totalorder %s175, %s176
      %p185 = scmp.eq.s32.totalorder %s27, 0
      %p186 = por %p184, %p185
      %p187 = scmp.ne.s32.totalorder %s175, %s176
      %p188 = scmp.eq.s32.totalorder %s28, 1
      %p189 = por %p187, %p188
      %p191 = scmp.ne.s32.totalorder %s176, %s190
      %p192 = scmp.eq.s32.totalorder %s28, 0
      %p193 = por %p191, %p192
      %s195 = sadd.s32 %s194, 1
      %p198 = scmp.eq.s32.totalorder %s22, 1
      %p199 = scmp.ne.s32.totalorder %s194, %s196
      %p200 = scmp.eq.s32.totalorder %s22, 0
      %p201 = por %p199, %p200
      %p202 = scmp.ne.s32.totalorder %s194, %s196
      %p203 = scmp.eq.s32.totalorder %s27, 1
      %p204 = por %p202, %p203
      %p205 = scmp.ne.s32.totalorder %s196, %s197
      %p206 = scmp.eq.s32.totalorder %s27, 0
      %p207 = por %p205, %p206
      %p208 = scmp.ne.s32.totalorder %s196, %s197
      %p209 = scmp.eq.s32.totalorder %s28, 1
      %p210 = por %p208, %p209
      %p212 = scmp.ne.s32.totalorder %s197, %s211
      %p213 = scmp.eq.s32.totalorder %s28, 0
      %p214 = por %p212, %p213
      %s216 = sadd.s32 %s215, 1
      %p219 = scmp.eq.s32.totalorder %s22, 1
      %p220 = scmp.ne.s32.totalorder %s215, %s217
      %p221 = scmp.eq.s32.totalorder %s22, 0
      %p222 = por %p220, %p221
      %p223 = scmp.ne.s32.totalorder %s215, %s217
      %p224 = scmp.eq.s32.totalorder %s27, 1
      %p225 = por %p223, %p224
      %p226 = scmp.ne.s32.totalorder %s217, %s218
      %p227 = scmp.eq.s32.totalorder %s27, 0
      %p228 = por %p226, %p227
      %p229 = scmp.ne.s32.totalorder %s217, %s218
      %p230 = scmp.eq.s32.totalorder %s28, 1
      %p231 = por %p229, %p230
      %p233 = scmp.ne.s32.totalorder %s218, %s232
      %p234 = scmp.eq.s32.totalorder %s28, 0
      %p235 = por %p233, %p234
      %s237 = sadd.s32 %s236, 1
      %p240 = scmp.eq.s32.totalorder %s22, 1
      %p241 = scmp.ne.s32.totalorder %s236, %s238
      %p242 = scmp.eq.s32.totalorder %s22, 0
      %p243 = por %p241, %p242
      %p244 = scmp.ne.s32.totalorder %s236, %s238
      %p245 = scmp.eq.s32.totalorder %s27, 1
      %p246 = por %p244, %p245
      %p247 = scmp.ne.s32.totalorder %s238, %s239
      %p248 = scmp.eq.s32.totalorder %s27, 0
      %p249 = por %p247, %p248
      %p250 = scmp.ne.s32.totalorder %s238, %s239
      %p251 = scmp.eq.s32.totalorder %s28, 1
      %p252 = por %p250, %p251
      %p254 = scmp.ne.s32.totalorder %s239, %s253
      %p255 = scmp.eq.s32.totalorder %s28, 0
      %p256 = por %p254, %p255
      %s258 = sadd.s32 %s257, 1
      %p261 = scmp.eq.s32.totalorder %s22, 1
      %p262 = scmp.ne.s32.totalorder %s257, %s259
      %p263 = scmp.eq.s32.totalorder %s22, 0
      %p264 = por %p262, %p263
      %p265 = scmp.ne.s32.totalorder %s257, %s259
      %p266 = scmp.eq.s32.totalorder %s27, 1
      %p267 = por %p265, %p266
      %p268 = scmp.ne.s32.totalorder %s259, %s260
      %p269 = scmp.eq.s32.totalorder %s27, 0
      %p270 = por %p268, %p269
      %p271 = scmp.ne.s32.totalorder %s259, %s260
      %p272 = scmp.eq.s32.totalorder %s28, 1
      %p273 = por %p271, %p272
      %p275 = scmp.ne.s32.totalorder %s260, %s274
      %p276 = scmp.eq.s32.totalorder %s28, 0
      %p277 = por %p275, %p276
      %s279 = sadd.s32 %s278, 1
      %p282 = scmp.eq.s32.totalorder %s22, 1
      %p283 = scmp.ne.s32.totalorder %s278, %s280
      %p284 = scmp.eq.s32.totalorder %s22, 0
      %p285 = por %p283, %p284
      %p286 = scmp.ne.s32.totalorder %s278, %s280
      %p287 = scmp.eq.s32.totalorder %s27, 1
      %p288 = por %p286, %p287
      %p289 = scmp.ne.s32.totalorder %s280, %s281
      %p290 = scmp.eq.s32.totalorder %s27, 0
      %p291 = por %p289, %p290
      %p292 = scmp.ne.s32.totalorder %s280, %s281
      %p293 = scmp.eq.s32.totalorder %s28, 1
      %p294 = por %p292, %p293
      %p296 = scmp.ne.s32.totalorder %s281, %s295
      %p297 = scmp.eq.s32.totalorder %s28, 0
      %p298 = por %p296, %p297
      %s300 = sadd.s32 %s299, 1
      %p303 = scmp.eq.s32.totalorder %s22, 1
      %p304 = scmp.ne.s32.totalorder %s299, %s301
      %p305 = scmp.eq.s32.totalorder %s22, 0
      %p306 = por %p304, %p305
      %p307 = scmp.ne.s32.totalorder %s299, %s301
      %p308 = scmp.eq.s32.totalorder %s27, 1
      %p309 = por %p307, %p308
      %p310 = scmp.ne.s32.totalorder %s301, %s302
      %p311 = scmp.eq.s32.totalorder %s27, 0
      %p312 = por %p310, %p311
      %p313 = scmp.ne.s32.totalorder %s301, %s302
      %p314 = scmp.eq.s32.totalorder %s28, 1
      %p315 = por %p313, %p314
      %p317 = scmp.ne.s32.totalorder %s302, %s316
      %p318 = scmp.eq.s32.totalorder %s28, 0
      %p319 = por %p317, %p318
      %s320 = ssub.s32 %s29, %s41
      %s321 = ssub.s32 %s30, %s37
      %s322 = sor.u32 %s320, %s321
      %p323 = scmp.eq.s32.totalorder %s322, 0
      %s325 = sadd.s32 %s324, 1
      %s326 = scalar_select %p323, %s324, %s325
      %p329 = pneg %p323
      %p330 = scmp.eq.s32.totalorder %s22, 1
      %p331 = por %p329, %p330
      %p332 = scmp.ne.s32.totalorder %s324, %s327
      %p333 = scmp.eq.s32.totalorder %s22, 0
      %p334 = por %p332, %p333
      %p335 = scmp.ne.s32.totalorder %s324, %s327
      %p336 = scmp.eq.s32.totalorder %s27, 1
      %p337 = por %p335, %p336
      %p338 = scmp.ne.s32.totalorder %s327, %s328
      %p339 = scmp.eq.s32.totalorder %s27, 0
      %p340 = por %p338, %p339
      %p341 = scmp.ne.s32.totalorder %s327, %s328
      %p342 = scmp.eq.s32.totalorder %s28, 1
      %p343 = por %p341, %p342
      %p345 = scmp.ne.s32.totalorder %s328, %s344
      %p346 = scmp.eq.s32.totalorder %s28, 0
      %p347 = por %p345, %p346
      %p348 = scmp.le.s32.totalorder 1, %s22
      %p349 = scmp.lt.s32.totalorder %s22, 3
      %p350 = pnand %p348, %p349
      %p351 = pneg %p350
      // Predicated region
      $region9: #{tpu_custom_call.1} parent=5 // pred_check
        _
      $region10: #{tpu_custom_call.1} parent=5 // pred_check_branch
        %353 = sbr.rel (%p350) target = $region12
      $region11: #{tpu_custom_call.1} parent=5 // pred_region
        %s354 = ssub.s32 %s22, 1
        // Predicated region
        $region13: #{tpu_custom_call.1} parent=11 // pred_check
          %p355 = pneg %p81
        $region14: #{tpu_custom_call.1} parent=11 // pred_check_branch
          %357 = sbr.rel (%p355) target = $region16
        $region15: #{tpu_custom_call.1} parent=11 // pred_region
          _
        $region16: #{tpu_custom_call.1} parent=11 // pred_fallthru
          _
        // Predicated region
        $region17: #{tpu_custom_call.1} parent=11 // pred_check
          %p358 = pneg %p102
        $region18: #{tpu_custom_call.1} parent=11 // pred_check_branch
          %360 = sbr.rel (%p358) target = $region20
        $region19: #{tpu_custom_call.1} parent=11 // pred_region
          _
        $region20: #{tpu_custom_call.1} parent=11 // pred_fallthru
          _
        // Predicated region
        $region21: #{tpu_custom_call.1} parent=11 // pred_check
          %p361 = pneg %p123
        $region22: #{tpu_custom_call.1} parent=11 // pred_check_branch
          %363 = sbr.rel (%p361) target = $region24
        $region23: #{tpu_custom_call.1} parent=11 // pred_region
          _
        $region24: #{tpu_custom_call.1} parent=11 // pred_fallthru
          _
        // Predicated region
        $region25: #{tpu_custom_call.1} parent=11 // pred_check
          %p364 = pneg %p144
        $region26: #{tpu_custom_call.1} parent=11 // pred_check_branch
          %366 = sbr.rel (%p364) target = $region28
        $region27: #{tpu_custom_call.1} parent=11 // pred_region
          _
        $region28: #{tpu_custom_call.1} parent=11 // pred_fallthru
          _
        // Predicated region
        $region29: #{tpu_custom_call.1} parent=11 // pred_check
          %p367 = pneg %p165
        $region30: #{tpu_custom_call.1} parent=11 // pred_check_branch
          %369 = sbr.rel (%p367) target = $region32
        $region31: #{tpu_custom_call.1} parent=11 // pred_region
          _
        $region32: #{tpu_custom_call.1} parent=11 // pred_fallthru
          _
        // Predicated region
        $region33: #{tpu_custom_call.1} parent=11 // pred_check
          %p370 = pneg %p186
        $region34: #{tpu_custom_call.1} parent=11 // pred_check_branch
          %372 = sbr.rel (%p370) target = $region36
        $region35: #{tpu_custom_call.1} parent=11 // pred_region
          _
        $region36: #{tpu_custom_call.1} parent=11 // pred_fallthru
          _
        // Predicated region
        $region37: #{tpu_custom_call.1} parent=11 // pred_check
          %p373 = pneg %p207
        $region38: #{tpu_custom_call.1} parent=11 // pred_check_branch
          %375 = sbr.rel (%p373) target = $region40
        $region39: #{tpu_custom_call.1} parent=11 // pred_region
          _
        $region40: #{tpu_custom_call.1} parent=11 // pred_fallthru
          _
        // Predicated region
        $region41: #{tpu_custom_call.1} parent=11 // pred_check
          %p376 = pneg %p228
        $region42: #{tpu_custom_call.1} parent=11 // pred_check_branch
          %378 = sbr.rel (%p376) target = $region44
        $region43: #{tpu_custom_call.1} parent=11 // pred_region
          _
        $region44: #{tpu_custom_call.1} parent=11 // pred_fallthru
          _
        // Predicated region
        $region45: #{tpu_custom_call.1} parent=11 // pred_check
          %p379 = pneg %p249
        $region46: #{tpu_custom_call.1} parent=11 // pred_check_branch
          %381 = sbr.rel (%p379) target = $region48
        $region47: #{tpu_custom_call.1} parent=11 // pred_region
          _
        $region48: #{tpu_custom_call.1} parent=11 // pred_fallthru
          _
        // Predicated region
        $region49: #{tpu_custom_call.1} parent=11 // pred_check
          %p382 = pneg %p270
        $region50: #{tpu_custom_call.1} parent=11 // pred_check_branch
          %384 = sbr.rel (%p382) target = $region52
        $region51: #{tpu_custom_call.1} parent=11 // pred_region
          _
        $region52: #{tpu_custom_call.1} parent=11 // pred_fallthru
          _
        // Predicated region
        $region53: #{tpu_custom_call.1} parent=11 // pred_check
          %p385 = pneg %p291
        $region54: #{tpu_custom_call.1} parent=11 // pred_check_branch
          %387 = sbr.rel (%p385) target = $region56
        $region55: #{tpu_custom_call.1} parent=11 // pred_region
          _
        $region56: #{tpu_custom_call.1} parent=11 // pred_fallthru
          _
        // Predicated region
        $region57: #{tpu_custom_call.1} parent=11 // pred_check
          %p388 = pneg %p312
        $region58: #{tpu_custom_call.1} parent=11 // pred_check_branch
          %390 = sbr.rel (%p388) target = $region60
        $region59: #{tpu_custom_call.1} parent=11 // pred_region
          _
        $region60: #{tpu_custom_call.1} parent=11 // pred_fallthru
          _
      $region12: #{tpu_custom_call.1} parent=5 // pred_fallthru
        _
      %p391 = scmp.lt.s32.totalorder %s22, 2
      // Predicated region
      $region61: #{tpu_custom_call.1} parent=5 // pred_check
        %p392 = pneg %p391
      $region62: #{tpu_custom_call.1} parent=5 // pred_check_branch
        %394 = sbr.rel (%p392) target = $region64
      $region63: #{tpu_custom_call.1} parent=5 // pred_region
        // Predicated region
        $region65: #{tpu_custom_call.1} parent=63 // pred_check
          %p395 = pneg %p54
        $region66: #{tpu_custom_call.1} parent=63 // pred_check_branch
          %397 = sbr.rel (%p395) target = $region68
        $region67: #{tpu_custom_call.1} parent=63 // pred_region
          %p398 = scmp.lt.s32.totalorder %s29, 1
          %s399 = scalar_select %p398, %s29, 1
          %s400 = smul.addr %s399, 8
          %s401 = scalar_lea.vmem %s0, %s400
        $region68: #{tpu_custom_call.1} parent=63 // pred_fallthru
          _
      $region64: #{tpu_custom_call.1} parent=5 // pred_fallthru
        _
      %p402 = scmp.le.s32.totalorder 1, %s22
      %p403 = scmp.lt.s32.totalorder %s22, 3
      %p404 = pnand %p402, %p403
      %p405 = pneg %p404
      // Predicated region
      $region69: #{tpu_custom_call.1} parent=5 // pred_check
        _
      $region70: #{tpu_custom_call.1} parent=5 // pred_check_branch
        %407 = sbr.rel (%p404) target = $region72
      $region71: #{tpu_custom_call.1} parent=5 // pred_region
        %s408 = ssub.s32 %s22, 1
        %p409 = scmp.lt.s32.totalorder %s31, 1
        %s410 = scalar_select %p409, %s31, 1
        %s411 = smul.addr %s410, 8
        %s412 = scalar_lea.vmem %s0, %s411
        %p413 = pneg %p60
        %p414 = pneg %p57
        %p415 = pneg %p81
        %p416 = pneg %p78
        %p417 = pneg %p102
        %p418 = pneg %p99
        %p419 = pneg %p123
        %p420 = pneg %p120
        %p421 = pneg %p144
        %p422 = pneg %p141
        %p423 = pneg %p165
        %p424 = pneg %p162
        %p425 = pneg %p186
        %p426 = pneg %p183
        %p427 = pneg %p207
        %p428 = pneg %p204
        %p429 = pneg %p228
        %p430 = pneg %p225
        %p431 = pneg %p249
        %p432 = pneg %p246
        %p433 = pneg %p270
        %p434 = pneg %p267
        %p435 = pneg %p291
        %p436 = pneg %p288
        %p437 = pneg %p312
        %p438 = pneg %p309
        %p439 = pneg %p340
        %p440 = pneg %p337
        %s441 = sand.u32 %s327, 1
        %s442 = scalar_lea.sflag [#allocation4], %s441
        %s443 = sand.u32 %s327, 1
        %s444 = smul.addr %s443, 8
        %s445 = scalar_lea.vmem [#allocation3], %s444
        %p446 = scmp.lt.s32.totalorder %s31, 1
        %s447 = scalar_select %p446, %s31, 1
        %s448 = smul.addr %s447, 8
        %s449 = scalar_lea.vmem %s0, %s448
        %p451 = scmp.eq.s32.totalorder %s32, 0
        // Predicated region
        $region73: #{tpu_custom_call.1} parent=71 // pred_check
          %p452 = pneg %p451
        $region74: #{tpu_custom_call.1} parent=71 // pred_check_branch
          %454 = sbr.rel (%p452) target = $region76
        $region75: #{tpu_custom_call.1} parent=71 // pred_region
          %v455 = vld [vmem:[%s449] sm:$0xff]
          %v456 = vpack.c.bf16 %v455, %v455
          %v457 = vld [vmem:[%s1] sm:$0xff]
          %v458 = vld [vmem:[%s1 + $0x8] sm:$0xff]
          %v459 = vld [vmem:[%s1 + $0x10] sm:$0xff]
          %v460 = vld [vmem:[%s1 + $0x18] sm:$0xff]
          %v461 = vld [vmem:[%s1 + $0x20] sm:$0xff]
          %v462 = vld [vmem:[%s1 + $0x28] sm:$0xff]
          %v463 = vld [vmem:[%s1 + $0x30] sm:$0xff]
          %v464 = vld [vmem:[%s1 + $0x38] sm:$0xff]
          %v465 = vld [vmem:[%s1 + $0x40] sm:$0xff]
          %v466 = vld [vmem:[%s1 + $0x48] sm:$0xff]
          %v467 = vld [vmem:[%s1 + $0x50] sm:$0xff]
          %v468 = vld [vmem:[%s1 + $0x58] sm:$0xff]
          %v469 = vld [vmem:[%s1 + $0x60] sm:$0xff]
          %v470 = vld [vmem:[%s1 + $0x68] sm:$0xff]
          %v471 = vld [vmem:[%s1 + $0x70] sm:$0xff]
          %v472 = vld [vmem:[%s1 + $0x78] sm:$0xff]
          %v473 = vld [vmem:[%s2] sm:$0x3]
          %v475 = vlaneseq
          %v476 = vshrl.u32 %v475, 7
          %v477 = vsub.s32 0, %v476
          %v478 = vrot.slane %v473, %v477
          %v479 = vlaneseq
          %v480 = vshrl.u32 %v479, 7
          %v481 = vsub.s32 1, %v480
          %v482 = vrot.slane %v473, %v481
          %v501 = vunpack.c.l.b16 %v457
          %v502 = vunpack.c.h.b16 %v457
          %v503 = vunpack.c.l.b16 %v458
          %v504 = vunpack.c.h.b16 %v458
          %v505 = vunpack.c.l.b16 %v459
          %v506 = vunpack.c.h.b16 %v459
          %v507 = vunpack.c.l.b16 %v460
          %v508 = vunpack.c.h.b16 %v460
          %v509 = vunpack.c.l.b16 %v461
          %v510 = vunpack.c.h.b16 %v461
          %v511 = vunpack.c.l.b16 %v462
          %v512 = vunpack.c.h.b16 %v462
          %v513 = vunpack.c.l.b16 %v463
          %v514 = vunpack.c.h.b16 %v463
          %v515 = vunpack.c.l.b16 %v464
          %v516 = vunpack.c.h.b16 %v464
          %v517 = vunpack.c.l.b16 %v465
          %v518 = vunpack.c.h.b16 %v465
          %v519 = vunpack.c.l.b16 %v466
          %v520 = vunpack.c.h.b16 %v466
          %v521 = vunpack.c.l.b16 %v467
          %v522 = vunpack.c.h.b16 %v467
          %v523 = vunpack.c.l.b16 %v468
          %v524 = vunpack.c.h.b16 %v468
          %v525 = vunpack.c.l.b16 %v469
          %v526 = vunpack.c.h.b16 %v469
          %v527 = vunpack.c.l.b16 %v470
          %v528 = vunpack.c.h.b16 %v470
          %v529 = vunpack.c.l.b16 %v471
          %v530 = vunpack.c.h.b16 %v471
          %v531 = vunpack.c.l.b16 %v472
          %v532 = vunpack.c.h.b16 %v472
          %v533 = vpack.c.b16 %v503, %v501
          %v534 = vpack.c.b16 %v504, %v502
          %v535 = vpack.c.b16 %v507, %v505
          %v536 = vpack.c.b16 %v508, %v506
          %v537 = vpack.c.b16 %v511, %v509
          %v538 = vpack.c.b16 %v512, %v510
          %v539 = vpack.c.b16 %v515, %v513
          %v540 = vpack.c.b16 %v516, %v514
          %v541 = vpack.c.b16 %v519, %v517
          %v542 = vpack.c.b16 %v520, %v518
          %v543 = vpack.c.b16 %v523, %v521
          %v544 = vpack.c.b16 %v524, %v522
          %v545 = vpack.c.b16 %v527, %v525
          %v546 = vpack.c.b16 %v528, %v526
          %v547 = vpack.c.b16 %v531, %v529
          %v548 = vpack.c.b16 %v532, %v530
          %565 = vmatprep.subr.bf16.mxu0 %v534
          %566 = vmatpush1.bf16.msra.mxu0 %v533
          %567 = vmatprep.subr.bf16.mxu0 %v536
          %568 = vmatpush1.bf16.msra.mxu0 %v535
          %569 = vmatprep.subr.bf16.mxu0 %v538
          %570 = vmatpush1.bf16.msra.mxu0 %v537
          %571 = vmatprep.subr.bf16.mxu0 %v540
          %572 = vmatpush1.bf16.msra.mxu0 %v539
          %573 = vmatprep.subr.bf16.mxu0 %v542
          %574 = vmatpush1.bf16.msra.mxu0 %v541
          %575 = vmatprep.subr.bf16.mxu0 %v544
          %576 = vmatpush1.bf16.msra.mxu0 %v543
          %577 = vmatprep.subr.bf16.mxu0 %v546
          %578 = vmatpush1.bf16.msra.mxu0 %v545
          %579 = vmatprep.subr.bf16.mxu0 %v548
          %580 = vmatpush1.bf16.msra.mxu0 %v547
          %581 = vmatprep.subr.bf16.mxu0 0
          %582 = vmatpush1.bf16.msra.mxu0 0
          %583 = vmatprep.subr.bf16.mxu0 0
          %584 = vmatpush1.bf16.msra.mxu0 0
          %585 = vmatprep.subr.bf16.mxu0 0
          %586 = vmatpush1.bf16.msra.mxu0 0
          %587 = vmatprep.subr.bf16.mxu0 0
          %588 = vmatpush1.bf16.msra.mxu0 0
          %589 = vmatprep.subr.bf16.mxu0 0
          %590 = vmatpush1.bf16.msra.mxu0 0
          %591 = vmatprep.subr.bf16.mxu0 0
          %592 = vmatpush1.bf16.msra.mxu0 0
          %593 = vmatprep.subr.bf16.mxu0 0
          %594 = vmatpush1.bf16.msra.mxu0 0
          %595 = vmatprep.subr.bf16.mxu0 0
          %596 = vmatpush1.bf16.msra.mxu0 0
          %597 = vmatprep.mubr.bf16.mxu0 0
          %598 = vmatmul.mubr.bf16.gmra.mrb[0].mxu0 %v456
          %v599 = vpop.f32.mrb[0].mxu0
          %v600 = vadd.f32 %v478, %v599
          %v601 = vpop.f32.mrb[0].mxu0
          %v602 = vadd.f32 %v482, %v601
          %v603 = vpop.f32.mrb[0].mxu0
          %v604 = vpop.f32.mrb[0].mxu0
          %605 = vdwg.mxu0
          %v606 = vpack.c.bf16 %v600, %v600
          %v607 = vpack.c.bf16 %v602, %v602
          %v610 = vunpack.c.l.b16 %v606
          %v611 = vunpack.c.l.b16 %v607
          %v612 = vpack.c.b16 %v611, %v610
          %vm614 = vcmask 1043456
          %vm615 = vcmask 523268
          %vm616 = vmor %vm615, %vm614
          %617 = vst.msk [vmem:[#allocation2] sm:$0xff] %vm616, %v612
        $region76: #{tpu_custom_call.1} parent=71 // pred_fallthru
          _
        %s618 = smul.u32 %s32, 8
        %s619 = scalar_lea.vmem %s449, %s618
        %v620 = vld [vmem:[%s619] sm:$0xff]
        %s621 = sshra.s32 %s618, 3
        %s622 = sand.u32 %s618, 7
        %s623 = smul.u32 %s621, 2
        %s624 = smul.addr %s623, 4
        %s625 = scalar_lea.vmem [#allocation2], %s624
        %v626 = vld [vmem:[%s625] sm:$0xff]
        %v627 = vld [vmem:[#allocation2] sm:$0xff]
        %v629 = vunpack.c.l.b16 %v627
        %v630 = vpack.c.b16 %v629, %v629
        %631 = vrot.lane.b32.xlu0 %v630, 64
        %v632 = vpop.permute.xlu0 %631
        %vm633 = vcmask 130048
        %v635 = vsel %vm633, %v626, 0
        %v638 = vsel %vm633, %v632, 0
        %640 = vmatprep.subr.bf16.mxu0 0
        %641 = vmatpush1.bf16.xpose.msra.mxu0 %v638
        %642 = vmatprep.subr.bf16.mxu0 0
        %643 = vmatpush1.bf16.xpose.msra.mxu0 0
        %644 = vmatprep.subr.bf16.mxu0 0
        %645 = vmatpush1.bf16.xpose.msra.mxu0 0
        %646 = vmatprep.subr.bf16.mxu0 0
        %647 = vmatpush1.bf16.xpose.msra.mxu0 0
        %648 = vmatprep.subr.bf16.mxu0 0
        %649 = vmatpush1.bf16.xpose.msra.mxu0 0
        %650 = vmatprep.subr.bf16.mxu0 0
        %651 = vmatpush1.bf16.xpose.msra.mxu0 0
        %652 = vmatprep.subr.bf16.mxu0 0
        %653 = vmatpush1.bf16.xpose.msra.mxu0 0
        %654 = vmatprep.subr.bf16.mxu0 0
        %655 = vmatpush1.bf16.xpose.msra.mxu0 0
        %656 = vmatprep.subr.bf16.mxu0 0
        %657 = vmatpush1.bf16.xpose.msra.mxu0 0
        %658 = vmatprep.subr.bf16.mxu0 0
        %659 = vmatpush1.bf16.xpose.msra.mxu0 0
        %660 = vmatprep.subr.bf16.mxu0 0
        %661 = vmatpush1.bf16.xpose.msra.mxu0 0
        %662 = vmatprep.subr.bf16.mxu0 0
        %663 = vmatpush1.bf16.xpose.msra.mxu0 0
        %664 = vmatprep.subr.bf16.mxu0 0
        %665 = vmatpush1.bf16.xpose.msra.mxu0 0
        %666 = vmatprep.subr.bf16.mxu0 0
        %667 = vmatpush1.bf16.xpose.msra.mxu0 0
        %668 = vmatprep.subr.bf16.mxu0 0
        %669 = vmatpush1.bf16.xpose.msra.mxu0 0
        %670 = vmatprep.subr.bf16.mxu0 0
        %671 = vmatpush1.bf16.xpose.msra.mxu0 0
        %672 = vmatprep.mubr.bf16.mxu0 0
        %673 = vmatmul.mubr.bf16.gmra.mrb[0].mxu0 %v635
        %v674 = vpop.f32.mrb[0].mxu0
        %v675 = vadd.f32 0.0, %v674
        %v676 = vpop.f32.mrb[0].mxu0
        %v677 = vpop.f32.mrb[0].mxu0
        %v678 = vpop.f32.mrb[0].mxu0
        %679 = vdwg.mxu0
        %v680 = vmul.f32 %v675, 0.25
        %vm681 = vcmask 64512
        %v682 = vsel %vm681, %v680, -inf
        %683 = vmax.xlane.f32.xlu0 %v682
        %v684 = vpop.xlane.xlu0 %683
        %v685 = vsub.f32 %v680, %v684
        %v686 = vmul.f32 %v685, 1.442695
        %v687 = vpow.pop %v686
        %v688 = vsel %vm681, %v687, 0.0
        %689 = vadd.xlane.f32.xlu0 %v688
        %v690 = vpop.xlane.xlu0 %689
        %v691 = vrcp.pop %v690
        %v692 = vmul.f32 %v687, %v691
        %v693 = vpack.c.bf16 %v692, %v692
        %v694 = vunpack.c.h.b16 %v627
        %v695 = vpack.c.b16 %v694, %v694
        %v697 = vsel %vm681, %v693, 0
        %vm699 = vcmask 1043456
        %v701 = vsel %vm699, %v695, 0
        %703 = vmatprep.subr.bf16.mxu0 0
        %704 = vmatpush1.bf16.msra.mxu0 %v701
        %705 = vmatprep.subr.bf16.mxu0 0
        %706 = vmatpush1.bf16.msra.mxu0 0
        %707 = vmatprep.subr.bf16.mxu0 0
        %708 = vmatpush1.bf16.msra.mxu0 0
        %709 = vmatprep.subr.bf16.mxu0 0
        %710 = vmatpush1.bf16.msra.mxu0 0
        %711 = vmatprep.subr.bf16.mxu0 0
        %712 = vmatpush1.bf16.msra.mxu0 0
        %713 = vmatprep.subr.bf16.mxu0 0
        %714 = vmatpush1.bf16.msra.mxu0 0
        %715 = vmatprep.subr.bf16.mxu0 0
        %716 = vmatpush1.bf16.msra.mxu0 0
        %717 = vmatprep.subr.bf16.mxu0 0
        %718 = vmatpush1.bf16.msra.mxu0 0
        %719 = vmatprep.subr.bf16.mxu0 0
        %720 = vmatpush1.bf16.msra.mxu0 0
        %721 = vmatprep.subr.bf16.mxu0 0
        %722 = vmatpush1.bf16.msra.mxu0 0
        %723 = vmatprep.subr.bf16.mxu0 0
        %724 = vmatpush1.bf16.msra.mxu0 0
        %725 = vmatprep.subr.bf16.mxu0 0
        %726 = vmatpush1.bf16.msra.mxu0 0
        %727 = vmatprep.subr.bf16.mxu0 0
        %728 = vmatpush1.bf16.msra.mxu0 0
        %729 = vmatprep.subr.bf16.mxu0 0
        %730 = vmatpush1.bf16.msra.mxu0 0
        %731 = vmatprep.subr.bf16.mxu0 0
        %732 = vmatpush1.bf16.msra.mxu0 0
        %733 = vmatprep.subr.bf16.mxu0 0
        %734 = vmatpush1.bf16.msra.mxu0 0
        %735 = vmatprep.mubr.bf16.mxu0 0
        %736 = vmatmul.mubr.bf16.gmra.mrb[0].mxu0 %v697
        %v737 = vpop.f32.mrb[0].mxu0
        %v738 = vadd.f32 0.0, %v737
        %v739 = vpop.f32.mrb[0].mxu0
        %v740 = vpop.f32.mrb[0].mxu0
        %v741 = vpop.f32.mrb[0].mxu0
        %742 = vdwg.mxu0
        %v744 = vunpack.c.l.b16 %v626
        %v745 = vpack.c.b16 %v744, %v744
        %746 = vrot.lane.b32.xlu0 %v745, 112
        %v747 = vpop.permute.xlu0 %746
        %748 = vrot.lane.b32.xlu0 %v630, 48
        %v749 = vpop.permute.xlu0 %748
        %v751 = vsel %vm633, %v747, 0
        %v754 = vsel %vm633, %v749, 0
        %756 = vmatprep.subr.bf16.mxu0 0
        %757 = vmatpush1.bf16.xpose.msra.mxu0 %v754
        %758 = vmatprep.subr.bf16.mxu0 0
        %759 = vmatpush1.bf16.xpose.msra.mxu0 0
        %760 = vmatprep.subr.bf16.mxu0 0
        %761 = vmatpush1.bf16.xpose.msra.mxu0 0
        %762 = vmatprep.subr.bf16.mxu0 0
        %763 = vmatpush1.bf16.xpose.msra.mxu0 0
        %764 = vmatprep.subr.bf16.mxu0 0
        %765 = vmatpush1.bf16.xpose.msra.mxu0 0
        %766 = vmatprep.subr.bf16.mxu0 0
        %767 = vmatpush1.bf16.xpose.msra.mxu0 0
        %768 = vmatprep.subr.bf16.mxu0 0
        %769 = vmatpush1.bf16.xpose.msra.mxu0 0
        %770 = vmatprep.subr.bf16.mxu0 0
        %771 = vmatpush1.bf16.xpose.msra.mxu0 0
        %772 = vmatprep.subr.bf16.mxu0 0
        %773 = vmatpush1.bf16.xpose.msra.mxu0 0
        %774 = vmatprep.subr.bf16.mxu0 0
        %775 = vmatpush1.bf16.xpose.msra.mxu0 0
        %776 = vmatprep.subr.bf16.mxu0 0
        %777 = vmatpush1.bf16.xpose.msra.mxu0 0
        %778 = vmatprep.subr.bf16.mxu0 0
        %779 = vmatpush1.bf16.xpose.msra.mxu0 0
        %780 = vmatprep.subr.bf16.mxu0 0
        %781 = vmatpush1.bf16.xpose.msra.mxu0 0
        %782 = vmatprep.subr.bf16.mxu0 0
        %783 = vmatpush1.bf16.xpose.msra.mxu0 0
        %784 = vmatprep.subr.bf16.mxu0 0
        %785 = vmatpush1.bf16.xpose.msra.mxu0 0
        %786 = vmatprep.subr.bf16.mxu0 0
        %787 = vmatpush1.bf16.xpose.msra.mxu0 0
        %788 = vmatprep.mubr.bf16.mxu0 0
        %789 = vmatmul.mubr.bf16.gmra.mrb[0].mxu0 %v751
        %v790 = vpop.f32.mrb[0].mxu0
        %v791 = vadd.f32 0.0, %v790
        %v792 = vpop.f32.mrb[0].mxu0
        %v793 = vpop.f32.mrb[0].mxu0
        %v794 = vpop.f32.mrb[0].mxu0
        %795 = vdwg.mxu0
        %v796 = vmul.f32 %v791, 0.25
        %v797 = vsel %vm681, %v796, -inf
        %798 = vmax.xlane.f32.xlu0 %v797
        %v799 = vpop.xlane.xlu0 %798
        %v800 = vsub.f32 %v796, %v799
        %v801 = vmul.f32 %v800, 1.442695
        %v802 = vpow.pop %v801
        %v803 = vsel %vm681, %v802, 0.0
        %804 = vadd.xlane.f32.xlu0 %v803
        %v805 = vpop.xlane.xlu0 %804
        %v806 = vrcp.pop %v805
        %v807 = vmul.f32 %v802, %v806
        %v808 = vpack.c.bf16 %v807, %v807
        %809 = vrot.lane.b32.xlu0 %v695, 112
        %v810 = vpop.permute.xlu0 %809
        %v812 = vsel %vm681, %v808, 0
        %v815 = vsel %vm699, %v810, 0
        %817 = vmatprep.subr.bf16.mxu0 0
        %818 = vmatpush1.bf16.msra.mxu0 %v815
        %819 = vmatprep.subr.bf16.mxu0 0
        %820 = vmatpush1.bf16.msra.mxu0 0
        %821 = vmatprep.subr.bf16.mxu0 0
        %822 = vmatpush1.bf16.msra.mxu0 0
        %823 = vmatprep.subr.bf16.mxu0 0
        %824 = vmatpush1.bf16.msra.mxu0 0
        %825 = vmatprep.subr.bf16.mxu0 0
        %826 = vmatpush1.bf16.msra.mxu0 0
        %827 = vmatprep.subr.bf16.mxu0 0
        %828 = vmatpush1.bf16.msra.mxu0 0
        %829 = vmatprep.subr.bf16.mxu0 0
        %830 = vmatpush1.bf16.msra.mxu0 0
        %831 = vmatprep.subr.bf16.mxu0 0
        %832 = vmatpush1.bf16.msra.mxu0 0
        %833 = vmatprep.subr.bf16.mxu0 0
        %834 = vmatpush1.bf16.msra.mxu0 0
        %835 = vmatprep.subr.bf16.mxu0 0
        %836 = vmatpush1.bf16.msra.mxu0 0
        %837 = vmatprep.subr.bf16.mxu0 0
        %838 = vmatpush1.bf16.msra.mxu0 0
        %839 = vmatprep.subr.bf16.mxu0 0
        %840 = vmatpush1.bf16.msra.mxu0 0
        %841 = vmatprep.subr.bf16.mxu0 0
        %842 = vmatpush1.bf16.msra.mxu0 0
        %843 = vmatprep.subr.bf16.mxu0 0
        %844 = vmatpush1.bf16.msra.mxu0 0
        %845 = vmatprep.subr.bf16.mxu0 0
        %846 = vmatpush1.bf16.msra.mxu0 0
        %847 = vmatprep.subr.bf16.mxu0 0
        %848 = vmatpush1.bf16.msra.mxu0 0
        %849 = vmatprep.mubr.bf16.mxu0 0
        %850 = vmatmul.mubr.bf16.gmra.mrb[0].mxu0 %v812
        %v851 = vpop.f32.mrb[0].mxu0
        %v852 = vadd.f32 0.0, %v851
        %v853 = vpop.f32.mrb[0].mxu0
        %v854 = vpop.f32.mrb[0].mxu0
        %v855 = vpop.f32.mrb[0].mxu0
        %856 = vdwg.mxu0
        %857 = vrot.lane.b32.xlu0 %v745, 96
        %v858 = vpop.permute.xlu0 %857
        %859 = vrot.lane.b32.xlu0 %v630, 32
        %v860 = vpop.permute.xlu0 %859
        %v862 = vsel %vm633, %v858, 0
        %v865 = vsel %vm633, %v860, 0
        %867 = vmatprep.subr.bf16.mxu0 0
        %868 = vmatpush1.bf16.xpose.msra.mxu0 %v865
        %869 = vmatprep.subr.bf16.mxu0 0
        %870 = vmatpush1.bf16.xpose.msra.mxu0 0
        %871 = vmatprep.subr.bf16.mxu0 0
        %872 = vmatpush1.bf16.xpose.msra.mxu0 0
        %873 = vmatprep.subr.bf16.mxu0 0
        %874 = vmatpush1.bf16.xpose.msra.mxu0 0
        %875 = vmatprep.subr.bf16.mxu0 0
        %876 = vmatpush1.bf16.xpose.msra.mxu0 0
        %877 = vmatprep.subr.bf16.mxu0 0
        %878 = vmatpush1.bf16.xpose.msra.mxu0 0
        %879 = vmatprep.subr.bf16.mxu0 0
        %880 = vmatpush1.bf16.xpose.msra.mxu0 0
        %881 = vmatprep.subr.bf16.mxu0 0
        %882 = vmatpush1.bf16.xpose.msra.mxu0 0
        %883 = vmatprep.subr.bf16.mxu0 0
        %884 = vmatpush1.bf16.xpose.msra.mxu0 0
        %885 = vmatprep.subr.bf16.mxu0 0
        %886 = vmatpush1.bf16.xpose.msra.mxu0 0
        %887 = vmatprep.subr.bf16.mxu0 0
        %888 = vmatpush1.bf16.xpose.msra.mxu0 0
        %889 = vmatprep.subr.bf16.mxu0 0
        %890 = vmatpush1.bf16.xpose.msra.mxu0 0
        %891 = vmatprep.subr.bf16.mxu0 0
        %892 = vmatpush1.bf16.xpose.msra.mxu0 0
        %893 = vmatprep.subr.bf16.mxu0 0
        %894 = vmatpush1.bf16.xpose.msra.mxu0 0
        %895 = vmatprep.subr.bf16.mxu0 0
        %896 = vmatpush1.bf16.xpose.msra.mxu0 0
        %897 = vmatprep.subr.bf16.mxu0 0
        %898 = vmatpush1.bf16.xpose.msra.mxu0 0
        %899 = vmatprep.mubr.bf16.mxu0 0
        %900 = vmatmul.mubr.bf16.gmra.mrb[0].mxu0 %v862
        %v901 = vpop.f32.mrb[0].mxu0
        %v902 = vadd.f32 0.0, %v901
        %v903 = vpop.f32.mrb[0].mxu0
        %v904 = vpop.f32.mrb[0].mxu0
        %v905 = vpop.f32.mrb[0].mxu0
        %906 = vdwg.mxu0
        %v907 = vmul.f32 %v902, 0.25
        %v908 = vsel %vm681, %v907, -inf
        %909 = vmax.xlane.f32.xlu0 %v908
        %v910 = vpop.xlane.xlu0 %909
        %v911 = vsub.f32 %v907, %v910
        %v912 = vmul.f32 %v911, 1.442695
        %v913 = vpow.pop %v912
        %v914 = vsel %vm681, %v913, 0.0
        %915 = vadd.xlane.f32.xlu0 %v914
        %v916 = vpop.xlane.xlu0 %915
        %v917 = vrcp.pop %v916
        %v918 = vmul.f32 %v913, %v917
        %v919 = vpack.c.bf16 %v918, %v918
        %920 = vrot.lane.b32.xlu0 %v695, 96
        %v921 = vpop.permute.xlu0 %920
        %v923 = vsel %vm681, %v919, 0
        %v926 = vsel %vm699, %v921, 0
        %928 = vmatprep.subr.bf16.mxu0 0
        %929 = vmatpush1.bf16.msra.mxu0 %v926
        %930 = vmatprep.subr.bf16.mxu0 0
        %931 = vmatpush1.bf16.msra.mxu0 0
        %932 = vmatprep.subr.bf16.mxu0 0
        %933 = vmatpush1.bf16.msra.mxu0 0
        %934 = vmatprep.subr.bf16.mxu0 0
        %935 = vmatpush1.bf16.msra.mxu0 0
        %936 = vmatprep.subr.bf16.mxu0 0
        %937 = vmatpush1.bf16.msra.mxu0 0
        %938 = vmatprep.subr.bf16.mxu0 0
        %939 = vmatpush1.bf16.msra.mxu0 0
        %940 = vmatprep.subr.bf16.mxu0 0
        %941 = vmatpush1.bf16.msra.mxu0 0
        %942 = vmatprep.subr.bf16.mxu0 0
        %943 = vmatpush1.bf16.msra.mxu0 0
        %944 = vmatprep.subr.bf16.mxu0 0
        %945 = vmatpush1.bf16.msra.mxu0 0
        %946 = vmatprep.subr.bf16.mxu0 0
        %947 = vmatpush1.bf16.msra.mxu0 0
        %948 = vmatprep.subr.bf16.mxu0 0
        %949 = vmatpush1.bf16.msra.mxu0 0
        %950 = vmatprep.subr.bf16.mxu0 0
        %951 = vmatpush1.bf16.msra.mxu0 0
        %952 = vmatprep.subr.bf16.mxu0 0
        %953 = vmatpush1.bf16.msra.mxu0 0
        %954 = vmatprep.subr.bf16.mxu0 0
        %955 = vmatpush1.bf16.msra.mxu0 0
        %956 = vmatprep.subr.bf16.mxu0 0
        %957 = vmatpush1.bf16.msra.mxu0 0
        %958 = vmatprep.subr.bf16.mxu0 0
        %959 = vmatpush1.bf16.msra.mxu0 0
        %960 = vmatprep.mubr.bf16.mxu0 0
        %961 = vmatmul.mubr.bf16.gmra.mrb[0].mxu0 %v923
        %v962 = vpop.f32.mrb[0].mxu0
        %v963 = vadd.f32 0.0, %v962
        %v964 = vpop.f32.mrb[0].mxu0
        %v965 = vpop.f32.mrb[0].mxu0
        %v966 = vpop.f32.mrb[0].mxu0
        %967 = vdwg.mxu0
        %968 = vrot.lane.b32.xlu0 %v745, 80
        %v969 = vpop.permute.xlu0 %968
        %970 = vrot.lane.b32.xlu0 %v630, 16
        %v971 = vpop.permute.xlu0 %970
        %v973 = vsel %vm633, %v969, 0
        %v976 = vsel %vm633, %v971, 0
        %978 = vmatprep.subr.bf16.mxu0 0
        %979 = vmatpush1.bf16.xpose.msra.mxu0 %v976
        %980 = vmatprep.subr.bf16.mxu0 0
        %981 = vmatpush1.bf16.xpose.msra.mxu0 0
        %982 = vmatprep.subr.bf16.mxu0 0
        %983 = vmatpush1.bf16.xpose.msra.mxu0 0
        %984 = vmatprep.subr.bf16.mxu0 0
        %985 = vmatpush1.bf16.xpose.msra.mxu0 0
        %986 = vmatprep.subr.bf16.mxu0 0
        %987 = vmatpush1.bf16.xpose.msra.mxu0 0
        %988 = vmatprep.subr.bf16.mxu0 0
        %989 = vmatpush1.bf16.xpose.msra.mxu0 0
        %990 = vmatprep.subr.bf16.mxu0 0
        %991 = vmatpush1.bf16.xpose.msra.mxu0 0
        %992 = vmatprep.subr.bf16.mxu0 0
        %993 = vmatpush1.bf16.xpose.msra.mxu0 0
        %994 = vmatprep.subr.bf16.mxu0 0
        %995 = vmatpush1.bf16.xpose.msra.mxu0 0
        %996 = vmatprep.subr.bf16.mxu0 0
        %997 = vmatpush1.bf16.xpose.msra.mxu0 0
        %998 = vmatprep.subr.bf16.mxu0 0
        %999 = vmatpush1.bf16.xpose.msra.mxu0 0
        %1000 = vmatprep.subr.bf16.mxu0 0
        %1001 = vmatpush1.bf16.xpose.msra.mxu0 0
        %1002 = vmatprep.subr.bf16.mxu0 0
        %1003 = vmatpush1.bf16.xpose.msra.mxu0 0
        %1004 = vmatprep.subr.bf16.mxu0 0
        %1005 = vmatpush1.bf16.xpose.msra.mxu0 0
        %1006 = vmatprep.subr.bf16.mxu0 0
        %1007 = vmatpush1.bf16.xpose.msra.mxu0 0
        %1008 = vmatprep.subr.bf16.mxu0 0
        %1009 = vmatpush1.bf16.xpose.msra.mxu0 0
        %1010 = vmatprep.mubr.bf16.mxu0 0
        %1011 = vmatmul.mubr.bf16.gmra.mrb[0].mxu0 %v973
        %v1012 = vpop.f32.mrb[0].mxu0
        %v1013 = vadd.f32 0.0, %v1012
        %v1014 = vpop.f32.mrb[0].mxu0
        %v1015 = vpop.f32.mrb[0].mxu0
        %v1016 = vpop.f32.mrb[0].mxu0
        %1017 = vdwg.mxu0
        %v1018 = vmul.f32 %v1013, 0.25
        %v1019 = vsel %vm681, %v1018, -inf
        %1020 = vmax.xlane.f32.xlu0 %v1019
        %v1021 = vpop.xlane.xlu0 %1020
        %v1022 = vsub.f32 %v1018, %v1021
        %v1023 = vmul.f32 %v1022, 1.442695
        %v1024 = vpow.pop %v1023
        %v1025 = vsel %vm681, %v1024, 0.0
        %1026 = vadd.xlane.f32.xlu0 %v1025
        %v1027 = vpop.xlane.xlu0 %1026
        %v1028 = vrcp.pop %v1027
        %v1029 = vmul.f32 %v1024, %v1028
        %v1030 = vpack.c.bf16 %v1029, %v1029
        %1031 = vrot.lane.b32.xlu0 %v695, 80
        %v1032 = vpop.permute.xlu0 %1031
        %v1034 = vsel %vm681, %v1030, 0
        %v1037 = vsel %vm699, %v1032, 0
        %1039 = vmatprep.subr.bf16.mxu0 0
        %1040 = vmatpush1.bf16.msra.mxu0 %v1037
        %1041 = vmatprep.subr.bf16.mxu0 0
        %1042 = vmatpush1.bf16.msra.mxu0 0
        %1043 = vmatprep.subr.bf16.mxu0 0
        %1044 = vmatpush1.bf16.msra.mxu0 0
        %1045 = vmatprep.subr.bf16.mxu0 0
        %1046 = vmatpush1.bf16.msra.mxu0 0
        %1047 = vmatprep.subr.bf16.mxu0 0
        %1048 = vmatpush1.bf16.msra.mxu0 0
        %1049 = vmatprep.subr.bf16.mxu0 0
        %1050 = vmatpush1.bf16.msra.mxu0 0
        %1051 = vmatprep.subr.bf16.mxu0 0
        %1052 = vmatpush1.bf16.msra.mxu0 0
        %1053 = vmatprep.subr.bf16.mxu0 0
        %1054 = vmatpush1.bf16.msra.mxu0 0
        %1055 = vmatprep.subr.bf16.mxu0 0
        %1056 = vmatpush1.bf16.msra.mxu0 0
        %1057 = vmatprep.subr.bf16.mxu0 0
        %1058 = vmatpush1.bf16.msra.mxu0 0
        %1059 = vmatprep.subr.bf16.mxu0 0
        %1060 = vmatpush1.bf16.msra.mxu0 0
        %1061 = vmatprep.subr.bf16.mxu0 0
        %1062 = vmatpush1.bf16.msra.mxu0 0
        %1063 = vmatprep.subr.bf16.mxu0 0
        %1064 = vmatpush1.bf16.msra.mxu0 0
        %1065 = vmatprep.subr.bf16.mxu0 0
        %1066 = vmatpush1.bf16.msra.mxu0 0
        %1067 = vmatprep.subr.bf16.mxu0 0
        %1068 = vmatpush1.bf16.msra.mxu0 0
        %1069 = vmatprep.subr.bf16.mxu0 0
        %1070 = vmatpush1.bf16.msra.mxu0 0
        %1071 = vmatprep.mubr.bf16.mxu0 0
        %1072 = vmatmul.mubr.bf16.gmra.mrb[0].mxu0 %v1034
        %v1073 = vpop.f32.mrb[0].mxu0
        %v1074 = vadd.f32 0.0, %v1073
        %v1075 = vpop.f32.mrb[0].mxu0
        %v1076 = vpop.f32.mrb[0].mxu0
        %v1077 = vpop.f32.mrb[0].mxu0
        %1078 = vdwg.mxu0
        %1080 = vrot.lane.b32.xlu0 %v852, 16
        %v1081 = vpop.permute.xlu0 %1080
        %1084 = vrot.lane.b32.xlu0 %v963, 32
        %v1085 = vpop.permute.xlu0 %1084
        %1088 = vrot.lane.b32.xlu0 %v1074, 48
        %v1089 = vpop.permute.xlu0 %1088
        %v1091 = vsel %vm633, %v738, %v1081
        %vm1092 = vcmask 261120
        %v1093 = vsel %vm1092, %v1091, %v1085
        %vm1094 = vcmask 392192
        %v1095 = vsel %vm1094, %v1093, %v1089
        %v1096 = vpack.c.bf16 %v1095, %v1095
        %v1097 = vld [vmem:[%s3] sm:$0xf]
        %v1098 = vld [vmem:[%s3 + $0x4] sm:$0xf]
        %v1099 = vld [vmem:[%s3 + $0x8] sm:$0xf]
        %v1100 = vld [vmem:[%s3 + $0xc] sm:$0xf]
        %v1101 = vld [vmem:[%s3 + $0x10] sm:$0xf]
        %v1102 = vld [vmem:[%s3 + $0x14] sm:$0xf]
        %v1103 = vld [vmem:[%s3 + $0x18] sm:$0xf]
        %v1104 = vld [vmem:[%s3 + $0x1c] sm:$0xf]
        %v1105 = vld [vmem:[%s4] sm:$0x1]
        %v1107 = vlaneseq
        %v1108 = vshrl.u32 %v1107, 7
        %v1109 = vsub.s32 0, %v1108
        %v1110 = vrot.slane %v1105, %v1109
        %v1120 = vunpack.c.l.b16 %v1097
        %v1121 = vunpack.c.l.b16 %v1098
        %v1122 = vunpack.c.l.b16 %v1099
        %v1123 = vunpack.c.l.b16 %v1100
        %v1124 = vunpack.c.l.b16 %v1101
        %v1125 = vunpack.c.l.b16 %v1102
        %v1126 = vunpack.c.l.b16 %v1103
        %v1127 = vunpack.c.l.b16 %v1104
        %v1128 = vpack.c.b16 %v1121, %v1120
        %v1129 = vpack.c.b16 %v1123, %v1122
        %v1130 = vpack.c.b16 %v1125, %v1124
        %v1131 = vpack.c.b16 %v1127, %v1126
        %vm1136 = vcmask 523264
        %v1138 = vsel %vm1136, %v1096, 0
        %1140 = vmatprep.subr.bf16.mxu0 0
        %1141 = vmatpush1.bf16.msra.mxu0 %v1128
        %1142 = vmatprep.subr.bf16.mxu0 0
        %1143 = vmatpush1.bf16.msra.mxu0 %v1129
        %1144 = vmatprep.subr.bf16.mxu0 0
        %1145 = vmatpush1.bf16.msra.mxu0 %v1130
        %1146 = vmatprep.subr.bf16.mxu0 0
        %1147 = vmatpush1.bf16.msra.mxu0 %v1131
        %1148 = vmatprep.subr.bf16.mxu0 0
        %1149 = vmatpush1.bf16.msra.mxu0 0
        %1150 = vmatprep.subr.bf16.mxu0 0
        %1151 = vmatpush1.bf16.msra.mxu0 0
        %1152 = vmatprep.subr.bf16.mxu0 0
        %1153 = vmatpush1.bf16.msra.mxu0 0
        %1154 = vmatprep.subr.bf16.mxu0 0
        %1155 = vmatpush1.bf16.msra.mxu0 0
        %1156 = vmatprep.subr.bf16.mxu0 0
        %1157 = vmatpush1.bf16.msra.mxu0 0
        %1158 = vmatprep.subr.bf16.mxu0 0
        %1159 = vmatpush1.bf16.msra.mxu0 0
        %1160 = vmatprep.subr.bf16.mxu0 0
        %1161 = vmatpush1.bf16.msra.mxu0 0
        %1162 = vmatprep.subr.bf16.mxu0 0
        %1163 = vmatpush1.bf16.msra.mxu0 0
        %1164 = vmatprep.subr.bf16.mxu0 0
        %1165 = vmatpush1.bf16.msra.mxu0 0
        %1166 = vmatprep.subr.bf16.mxu0 0
        %1167 = vmatpush1.bf16.msra.mxu0 0
        %1168 = vmatprep.subr.bf16.mxu0 0
        %1169 = vmatpush1.bf16.msra.mxu0 0
        %1170 = vmatprep.subr.bf16.mxu0 0
        %1171 = vmatpush1.bf16.msra.mxu0 0
        %1172 = vmatprep.mubr.bf16.mxu0 0
        %1173 = vmatmul.mubr.bf16.gmra.mrb[0].mxu0 %v1138
        %v1174 = vpop.f32.mrb[0].mxu0
        %v1175 = vadd.f32 %v1110, %v1174
        %v1176 = vpop.f32.mrb[0].mxu0
        %v1177 = vpop.f32.mrb[0].mxu0
        %v1178 = vpop.f32.mrb[0].mxu0
        %1179 = vdwg.mxu0
        %v1180 = vlaneseq
        %v1181 = vand.u32 %v1180, 127
        %vm1182 = vcmp.lt.s32.totalorder %v1181, 64
        %v1183 = vadd.f32 %v620, %v1175
        %v1184 = vld [vmem:[%s5] sm:$0x1]
        %v1185 = vld [vmem:[%s6] sm:$0x1]
        %1186 = vadd.xlane.f32.xlu0 %v1183
        %v1187 = vpop.xlane.xlu0 %1186
        %v1188 = vmul.f32 %v1187, 0.015625
        %v1189 = vsub.f32 %v1183, %v1188
        %v1190 = vsel %vm1182, %v1189, 0.0
        %v1191 = vmul.f32 %v1190, %v1190
        %1192 = vadd.xlane.f32.xlu0 %v1191
        %v1193 = vpop.xlane.xlu0 %1192
        %v1194 = vmul.f32 %v1193, 0.015625
        %v1195 = vadd.f32 %v1194, 1e-05
        %v1196 = vrsqrt.pop %v1195
        %v1197 = vmul.f32 %v1190, %v1196
        %v1199 = vlaneseq
        %v1200 = vshrl.u32 %v1199, 7
        %v1201 = vsub.s32 0, %v1200
        %v1202 = vrot.slane %v1184, %v1201
        %v1204 = vmul.f32 %v1197, %v1202
        %v1206 = vlaneseq
        %v1207 = vshrl.u32 %v1206, 7
        %v1208 = vsub.s32 0, %v1207
        %v1209 = vrot.slane %v1185, %v1208
        %v1211 = vadd.f32 %v1204, %v1209
        %v1212 = vpack.c.bf16 %v1211, %v1211
        %v1213 = vld [vmem:[%s7] sm:$0xf]
        %v1214 = vld [vmem:[%s7 + $0x4] sm:$0xf]
        %v1215 = vld [vmem:[%s7 + $0x8] sm:$0xf]
        %v1216 = vld [vmem:[%s7 + $0xc] sm:$0xf]
        %v1217 = vld [vmem:[%s7 + $0x10] sm:$0xf]
        %v1218 = vld [vmem:[%s7 + $0x14] sm:$0xf]
        %v1219 = vld [vmem:[%s7 + $0x18] sm:$0xf]
        %v1220 = vld [vmem:[%s7 + $0x1c] sm:$0xf]
        %v1221 = vld [vmem:[%s7 + $0x20] sm:$0xf]
        %v1222 = vld [vmem:[%s7 + $0x24] sm:$0xf]
        %v1223 = vld [vmem:[%s7 + $0x28] sm:$0xf]
        %v1224 = vld [vmem:[%s7 + $0x2c] sm:$0xf]
        %v1225 = vld [vmem:[%s7 + $0x30] sm:$0xf]
        %v1226 = vld [vmem:[%s7 + $0x34] sm:$0xf]
        %v1227 = vld [vmem:[%s7 + $0x38] sm:$0xf]
        %v1228 = vld [vmem:[%s7 + $0x3c] sm:$0xf]
        %v1229 = vld [vmem:[%s8] sm:$0x1]
        %v1231 = vlaneseq
        %v1232 = vshrl.u32 %v1231, 7
        %v1233 = vsub.s32 0, %v1232
        %v1234 = vrot.slane %v1229, %v1233
        %v1252 = vunpack.c.l.b16 %v1213
        %v1253 = vunpack.c.l.b16 %v1214
        %v1254 = vunpack.c.l.b16 %v1215
        %v1255 = vunpack.c.l.b16 %v1216
        %v1256 = vunpack.c.l.b16 %v1217
        %v1257 = vunpack.c.l.b16 %v1218
        %v1258 = vunpack.c.l.b16 %v1219
        %v1259 = vunpack.c.l.b16 %v1220
        %v1260 = vunpack.c.l.b16 %v1221
        %v1261 = vunpack.c.l.b16 %v1222
        %v1262 = vunpack.c.l.b16 %v1223
        %v1263 = vunpack.c.l.b16 %v1224
        %v1264 = vunpack.c.l.b16 %v1225
        %v1265 = vunpack.c.l.b16 %v1226
        %v1266 = vunpack.c.l.b16 %v1227
        %v1267 = vunpack.c.l.b16 %v1228
        %v1268 = vpack.c.b16 %v1253, %v1252
        %v1269 = vpack.c.b16 %v1255, %v1254
        %v1270 = vpack.c.b16 %v1257, %v1256
        %v1271 = vpack.c.b16 %v1259, %v1258
        %v1272 = vpack.c.b16 %v1261, %v1260
        %v1273 = vpack.c.b16 %v1263, %v1262
        %v1274 = vpack.c.b16 %v1265, %v1264
        %v1275 = vpack.c.b16 %v1267, %v1266
        %1284 = vmatprep.subr.bf16.mxu0 0
        %1285 = vmatpush1.bf16.msra.mxu0 %v1268
        %1286 = vmatprep.subr.bf16.mxu0 0
        %1287 = vmatpush1.bf16.msra.mxu0 %v1269
        %1288 = vmatprep.subr.bf16.mxu0 0
        %1289 = vmatpush1.bf16.msra.mxu0 %v1270
        %1290 = vmatprep.subr.bf16.mxu0 0
        %1291 = vmatpush1.bf16.msra.mxu0 %v1271
        %1292 = vmatprep.subr.bf16.mxu0 0
        %1293 = vmatpush1.bf16.msra.mxu0 %v1272
        %1294 = vmatprep.subr.bf16.mxu0 0
        %1295 = vmatpush1.bf16.msra.mxu0 %v1273
        %1296 = vmatprep.subr.bf16.mxu0 0
        %1297 = vmatpush1.bf16.msra.mxu0 %v1274
        %1298 = vmatprep.subr.bf16.mxu0 0
        %1299 = vmatpush1.bf16.msra.mxu0 %v1275
        %1300 = vmatprep.subr.bf16.mxu0 0
        %1301 = vmatpush1.bf16.msra.mxu0 0
        %1302 = vmatprep.subr.bf16.mxu0 0
        %1303 = vmatpush1.bf16.msra.mxu0 0
        %1304 = vmatprep.subr.bf16.mxu0 0
        %1305 = vmatpush1.bf16.msra.mxu0 0
        %1306 = vmatprep.subr.bf16.mxu0 0
        %1307 = vmatpush1.bf16.msra.mxu0 0
        %1308 = vmatprep.subr.bf16.mxu0 0
        %1309 = vmatpush1.bf16.msra.mxu0 0
        %1310 = vmatprep.subr.bf16.mxu0 0
        %1311 = vmatpush1.bf16.msra.mxu0 0
        %1312 = vmatprep.subr.bf16.mxu0 0
        %1313 = vmatpush1.bf16.msra.mxu0 0
        %1314 = vmatprep.subr.bf16.mxu0 0
        %1315 = vmatpush1.bf16.msra.mxu0 0
        %1316 = vmatprep.mubr.bf16.mxu0 0
        %1317 = vmatmul.mubr.bf16.gmra.mrb[0].mxu0 %v1212
        %v1318 = vpop.f32.mrb[0].mxu0
        %v1319 = vadd.f32 %v1234, %v1318
        %v1320 = vpop.f32.mrb[0].mxu0
        %v1321 = vpop.f32.mrb[0].mxu0
        %v1322 = vpop.f32.mrb[0].mxu0
        %1323 = vdwg.mxu0
        %v1324 = vmax.f32 %v1319, 0.0
        %v1325 = vpack.c.bf16 %v1324, %v1324
        %v1326 = vld [vmem:[%s9] sm:$0xf]
        %v1327 = vld [vmem:[%s9 + $0x4] sm:$0xf]
        %v1328 = vld [vmem:[%s9 + $0x8] sm:$0xf]
        %v1329 = vld [vmem:[%s9 + $0xc] sm:$0xf]
        %v1330 = vld [vmem:[%s9 + $0x10] sm:$0xf]
        %v1331 = vld [vmem:[%s9 + $0x14] sm:$0xf]
        %v1332 = vld [vmem:[%s9 + $0x18] sm:$0xf]
        %v1333 = vld [vmem:[%s9 + $0x1c] sm:$0xf]
        %v1334 = vld [vmem:[%s9 + $0x20] sm:$0xf]
        %v1335 = vld [vmem:[%s9 + $0x24] sm:$0xf]
        %v1336 = vld [vmem:[%s9 + $0x28] sm:$0xf]
        %v1337 = vld [vmem:[%s9 + $0x2c] sm:$0xf]
        %v1338 = vld [vmem:[%s9 + $0x30] sm:$0xf]
        %v1339 = vld [vmem:[%s9 + $0x34] sm:$0xf]
        %v1340 = vld [vmem:[%s9 + $0x38] sm:$0xf]
        %v1341 = vld [vmem:[%s9 + $0x3c] sm:$0xf]
        %v1342 = vld [vmem:[%s10] sm:$0x1]
        %v1344 = vlaneseq
        %v1345 = vshrl.u32 %v1344, 7
        %v1346 = vsub.s32 0, %v1345
        %v1347 = vrot.slane %v1342, %v1346
        %v1365 = vunpack.c.l.b16 %v1326
        %v1366 = vunpack.c.l.b16 %v1327
        %v1367 = vunpack.c.l.b16 %v1328
        %v1368 = vunpack.c.l.b16 %v1329
        %v1369 = vunpack.c.l.b16 %v1330
        %v1370 = vunpack.c.l.b16 %v1331
        %v1371 = vunpack.c.l.b16 %v1332
        %v1372 = vunpack.c.l.b16 %v1333
        %v1373 = vunpack.c.l.b16 %v1334
        %v1374 = vunpack.c.l.b16 %v1335
        %v1375 = vunpack.c.l.b16 %v1336
        %v1376 = vunpack.c.l.b16 %v1337
        %v1377 = vunpack.c.l.b16 %v1338
        %v1378 = vunpack.c.l.b16 %v1339
        %v1379 = vunpack.c.l.b16 %v1340
        %v1380 = vunpack.c.l.b16 %v1341
        %v1381 = vpack.c.b16 %v1366, %v1365
        %v1382 = vpack.c.b16 %v1368, %v1367
        %v1383 = vpack.c.b16 %v1370, %v1369
        %v1384 = vpack.c.b16 %v1372, %v1371
        %v1385 = vpack.c.b16 %v1374, %v1373
        %v1386 = vpack.c.b16 %v1376, %v1375
        %v1387 = vpack.c.b16 %v1378, %v1377
        %v1388 = vpack.c.b16 %v1380, %v1379
        %1397 = vmatprep.subr.bf16.mxu0 0
        %1398 = vmatpush1.bf16.msra.mxu0 %v1381
        %1399 = vmatprep.subr.bf16.mxu0 0
        %1400 = vmatpush1.bf16.msra.mxu0 %v1382
        %1401 = vmatprep.subr.bf16.mxu0 0
        %1402 = vmatpush1.bf16.msra.mxu0 %v1383
        %1403 = vmatprep.subr.bf16.mxu0 0
        %1404 = vmatpush1.bf16.msra.mxu0 %v1384
        %1405 = vmatprep.subr.bf16.mxu0 0
        %1406 = vmatpush1.bf16.msra.mxu0 %v1385
        %1407 = vmatprep.subr.bf16.mxu0 0
        %1408 = vmatpush1.bf16.msra.mxu0 %v1386
        %1409 = vmatprep.subr.bf16.mxu0 0
        %1410 = vmatpush1.bf16.msra.mxu0 %v1387
        %1411 = vmatprep.subr.bf16.mxu0 0
        %1412 = vmatpush1.bf16.msra.mxu0 %v1388
        %1413 = vmatprep.subr.bf16.mxu0 0
        %1414 = vmatpush1.bf16.msra.mxu0 0
        %1415 = vmatprep.subr.bf16.mxu0 0
        %1416 = vmatpush1.bf16.msra.mxu0 0
        %1417 = vmatprep.subr.bf16.mxu0 0
        %1418 = vmatpush1.bf16.msra.mxu0 0
        %1419 = vmatprep.subr.bf16.mxu0 0
        %1420 = vmatpush1.bf16.msra.mxu0 0
        %1421 = vmatprep.subr.bf16.mxu0 0
        %1422 = vmatpush1.bf16.msra.mxu0 0
        %1423 = vmatprep.subr.bf16.mxu0 0
        %1424 = vmatpush1.bf16.msra.mxu0 0
        %1425 = vmatprep.subr.bf16.mxu0 0
        %1426 = vmatpush1.bf16.msra.mxu0 0
        %1427 = vmatprep.subr.bf16.mxu0 0
        %1428 = vmatpush1.bf16.msra.mxu0 0
        %1429 = vmatprep.mubr.bf16.mxu0 0
        %1430 = vmatmul.mubr.bf16.gmra.mrb[0].mxu0 %v1325
        %v1431 = vpop.f32.mrb[0].mxu0
        %v1432 = vadd.f32 %v1347, %v1431
        %v1433 = vpop.f32.mrb[0].mxu0
        %v1434 = vpop.f32.mrb[0].mxu0
        %v1435 = vpop.f32.mrb[0].mxu0
        %1436 = vdwg.mxu0
        %v1437 = vadd.f32 %v1211, %v1432
        %v1438 = vld [vmem:[%s11] sm:$0x1]
        %v1439 = vld [vmem:[%s12] sm:$0x1]
        %1440 = vadd.xlane.f32.xlu0 %v1437
        %v1441 = vpop.xlane.xlu0 %1440
        %v1442 = vmul.f32 %v1441, 0.015625
        %v1443 = vsub.f32 %v1437, %v1442
        %v1444 = vsel %vm1182, %v1443, 0.0
        %v1445 = vmul.f32 %v1444, %v1444
        %1446 = vadd.xlane.f32.xlu0 %v1445
        %v1447 = vpop.xlane.xlu0 %1446
        %v1448 = vmul.f32 %v1447, 0.015625
        %v1449 = vadd.f32 %v1448, 1e-05
        %v1450 = vrsqrt.pop %v1449
        %v1451 = vmul.f32 %v1444, %v1450
        %v1453 = vlaneseq
        %v1454 = vshrl.u32 %v1453, 7
        %v1455 = vsub.s32 0, %v1454
        %v1456 = vrot.slane %v1438, %v1455
        %v1458 = vmul.f32 %v1451, %v1456
        %v1460 = vlaneseq
        %v1461 = vshrl.u32 %v1460, 7
        %v1462 = vsub.s32 0, %v1461
        %v1463 = vrot.slane %v1439, %v1462
        %v1465 = vadd.f32 %v1458, %v1463
        %1466 = vst [vmem:[%s445] sm:$0xff] %v1465
        %s1467 = sand.u32 %s327, 1
        %s1468 = scalar_lea.sflag [#allocation4], %s1467
        %s1469 = sand.u32 %s327, 1
        %s1470 = smul.addr %s1469, 8
        %s1471 = scalar_lea.vmem [#allocation3], %s1470
        // Predicated region
        $region77: #{tpu_custom_call.1} parent=71 // pred_check
          %p1472 = pneg %p337
        $region78: #{tpu_custom_call.1} parent=71 // pred_check_branch
          %1474 = sbr.rel (%p1472) target = $region80
        $region79: #{tpu_custom_call.1} parent=71 // pred_region
          %s1476 = ssub.s32 128, 128
          %1477 = vsyncadd %s1468, %s1476
          %s1478 = sadd.s32 %s32, %s31
          %s1479 = smul.addr %s1478, 128
          %s1480 = scalar_lea.hbm %s13, %s1479
          %s1482 = sshll.u32 %s1471, 4
          %s1483 = int_to_ptr.vmem [resolvable:$true] %s1482
          %1485 = dma.vmem_to_hbm [thread:$0]  %s1483, 128, %s1480, %s1468
        $region80: #{tpu_custom_call.1} parent=71 // pred_fallthru
          _
      $region72: #{tpu_custom_call.1} parent=5 // pred_fallthru
        _
      %p1486 = scmp.le.s32.totalorder 2, %s22
      // Predicated region
      $region81: #{tpu_custom_call.1} parent=5 // pred_check
        %p1487 = pneg %p1486
      $region82: #{tpu_custom_call.1} parent=5 // pred_check_branch
        %1489 = sbr.rel (%p1487) target = $region84
      $region83: #{tpu_custom_call.1} parent=5 // pred_region
        %s1490 = ssub.s32 %s22, 2
        // Predicated region
        $region85: #{tpu_custom_call.1} parent=83 // pred_check
          %p1491 = pneg %p343
        $region86: #{tpu_custom_call.1} parent=83 // pred_check_branch
          %1493 = sbr.rel (%p1491) target = $region88
        $region87: #{tpu_custom_call.1} parent=83 // pred_region
          %s1494 = sand.u32 %s328, 1
          %s1495 = scalar_lea.sflag [#allocation4], %s1494
          %s1496 = sand.u32 %s328, 1
          %s1497 = smul.addr %s1496, 8
          %s1498 = scalar_lea.vmem [#allocation3], %s1497
          %1499 = dma.done %s1495, 128
        $region88: #{tpu_custom_call.1} parent=83 // pred_fallthru
          _
      $region84: #{tpu_custom_call.1} parent=5 // pred_fallthru
        _
    $region6: #{tpu_custom_call.1} parent=1 // loop_footer
      %s26 = sadd.s32 1, %s22
    $region7: #{tpu_custom_call.1} parent=1 // loop_footer_branch
      %21 = sbr.rel target = $region3
    $region8: #{tpu_custom_call.1} parent=1 // loop_exit
      _
    %1500 = vsyncpa [#allocation4], 1
    %s1501 = scalar_lea.sflag [#allocation4], 1
    %1502 = vsyncpa %s1501, 1

</llo_original>
